<compile_context>
chip_gen: v7x
topology: tpu7x:2x2x1
jax: 0.10.0
libtpu: 0.0.40
codegen_flags: <defaults>
</compile_context>

<pallas_src>
import functools

import jax
import jax.numpy as jnp
import numpy as np
from jax.experimental import pallas as pl
from jax.experimental.pallas import tpu as pltpu

DEFAULT_MASK_VALUE = -0.7 * float(np.finfo(np.float32).max)
LN_EPS = 1e-5


# ----------------------------- kernel helpers ------------------------------

def _layer_norm(x, g, b):
    # x: [..., H]; g, b: [1, H]
    mean = jnp.mean(x, axis=-1, keepdims=True)
    var = jnp.mean((x - mean) ** 2, axis=-1, keepdims=True)
    return (x - mean) * jax.lax.rsqrt(var + LN_EPS) * g + b


def _quick_gelu(x):
    # x * sigmoid(1.702 * x)
    return x * (1.0 / (1.0 + jnp.exp(-1.702 * x)))


# ------------------------- fused encoder-stack kernel ------------------------

def encoder_stack_kernel(x_ref, mask_ref,
                         ln1_g_ref, ln1_b_ref,
                         wqkv_ref, bqkv_ref,
                         wo_ref, bo_ref,
                         ln2_g_ref, ln2_b_ref,
                         w1_ref, b1_ref, w2_ref, b2_ref,
                         out_ref, carry_ref,
                         *, num_heads, scale):
    layer = pl.program_id(1)
    n_layers = pl.num_programs(1)

    # Load the batch block of hidden states into the VMEM carry on layer 0.
    @pl.when(layer == 0)
    def _():
        carry_ref[...] = x_ref[...]

    x = carry_ref[...]                        # [Bb, S, H] fp32
    Bb, S, H = x.shape
    hd = H // num_heads
    m = mask_ref[...]                         # [Bb, S, S] additive mask

    # ---------------- self-attention block (pre-LN) ----------------
    xn = _layer_norm(x, ln1_g_ref[0], ln1_b_ref[0])           # fp32
    xn_bf = xn.reshape(Bb * S, H).astype(jnp.bfloat16)

    # Fused QKV projection: one full-width MXU matmul (bf16 in, fp32 accum).
    qkv = jnp.dot(xn_bf, wqkv_ref[0],
                  preferred_element_type=jnp.float32) + bqkv_ref[0]
    qkv = qkv.reshape(Bb, S, 3 * H)
    q = qkv[..., 0:H] * scale                 # scale on q (cheaper than on [S,S])
    k = qkv[..., H:2 * H]
    v = qkv[..., 2 * H:3 * H]
    qb = q.astype(jnp.bfloat16)
    kb = k.astype(jnp.bfloat16)
    vb = v.astype(jnp.bfloat16)

    # Per-head softmax attention; contexts concatenated for ONE output matmul.
    ctx_parts = []
    for h in range(num_heads):
        sl = slice(h * hd, (h + 1) * hd)
        s = jnp.einsum('bqd,bkd->bqk', qb[..., sl], kb[..., sl],
                       preferred_element_type=jnp.float32) + m
        s = s - jnp.max(s, axis=-1, keepdims=True)
        p = jnp.exp(s)
        p = p * pl.reciprocal(jnp.sum(p, axis=-1, keepdims=True), approx=True)
        ctx_parts.append(
            jnp.einsum('bqk,bkd->bqd', p.astype(jnp.bfloat16), vb[..., sl],
                       preferred_element_type=jnp.float32))
    ctx = jnp.concatenate(ctx_parts, axis=-1)                 # [Bb, S, H] fp32

    attn = jnp.dot(ctx.reshape(Bb * S, H).astype(jnp.bfloat16), wo_ref[0],
                   preferred_element_type=jnp.float32) + bo_ref[0]
    x = x + attn.reshape(Bb, S, H)

    # ---------------------- MLP block (pre-LN) ----------------------
    xn = _layer_norm(x, ln2_g_ref[0], ln2_b_ref[0])
    h1 = jnp.dot(xn.reshape(Bb * S, H).astype(jnp.bfloat16), w1_ref[0],
                 preferred_element_type=jnp.float32) + b1_ref[0]
    h1 = _quick_gelu(h1)
    h2 = jnp.dot(h1.astype(jnp.bfloat16), w2_ref[0],
                 preferred_element_type=jnp.float32) + b2_ref[0]
    x = x + h2.reshape(Bb, S, H)

    carry_ref[...] = x

    # Write the result to HBM only after the last layer.
    @pl.when(layer == n_layers - 1)
    def _():
        out_ref[...] = carry_ref[...]


# ------------------------------- wrapper ------------------------------------

def encoder_forward(x, mask, params, num_heads, *, block_b=None):
    """Encoder.forward(x, mask): x [B,S,H] fp32, mask [B,S,S] additive (or None)."""
    B, S, H = x.shape
    L = params["wqkv"].shape[0]
    M = params["w1"].shape[2]
    scale = (H // num_heads) ** (-0.5)

    if mask is None:
        mask = jnp.zeros((B, S, S), jnp.float32)

    if block_b is None:
        # Prefer >=2 batch blocks so both v7x TensorCores get work.
        block_b = B if (B % 2 or B == 1) else B // 2
    assert B % block_b == 0
    grid = (B // block_b, L)

    def per_layer(shape):  # stacked weight: pick layer l
        return pl.BlockSpec((1,) + shape, lambda b, l: (l, 0, 0))

    in_specs = [
        pl.BlockSpec((block_b, S, H), lambda b, l: (b, 0, 0)),   # x
        pl.BlockSpec((block_b, S, S), lambda b, l: (b, 0, 0)),   # mask
        per_layer((1, H)), per_layer((1, H)),                    # ln1 g, b
        per_layer((H, 3 * H)), per_layer((1, 3 * H)),            # wqkv, bqkv
        per_layer((H, H)), per_layer((1, H)),                    # wo, bo
        per_layer((1, H)), per_layer((1, H)),                    # ln2 g, b
        per_layer((H, M)), per_layer((1, M)),                    # w1, b1
        per_layer((M, H)), per_layer((1, H)),                    # w2, b2
    ]
    out_spec = pl.BlockSpec((block_b, S, H), lambda b, l: (b, 0, 0))

    kernel = functools.partial(encoder_stack_kernel,
                               num_heads=num_heads, scale=scale)
    return pl.pallas_call(
        kernel,
        grid=grid,
        in_specs=in_specs,
        out_specs=out_spec,
        out_shape=jax.ShapeDtypeStruct((B, S, H), jnp.float32),
        scratch_shapes=[pltpu.VMEM((block_b, S, H), jnp.float32)],
        compiler_params=pltpu.CompilerParams(
            dimension_semantics=("parallel", "arbitrary"),
            vmem_limit_bytes=48 * 1024 * 1024),
    )(x, mask,
      params["ln1_g"], params["ln1_b"],
      params["wqkv"], params["bqkv"],
      params["wo"], params["bo"],
      params["ln2_g"], params["ln2_b"],
      params["w1"], params["b1"],
      params["w2"], params["b2"])


# ---------------------------- pure-JAX reference ----------------------------

def ref_encoder(x, mask, params, num_heads):
    B, S, H = x.shape
    hd = H // num_heads
    scale = hd ** (-0.5)
    L = params["wqkv"].shape[0]

    def ln(x, g, b):
        mean = x.mean(-1, keepdims=True)
        var = ((x - mean) ** 2).mean(-1, keepdims=True)
        return (x - mean) / jnp.sqrt(var + LN_EPS) * g + b

    for l in range(L):
        wqkv = params["wqkv"][l].astype(jnp.float32)
        wo = params["wo"][l].astype(jnp.float32)
        w1 = params["w1"][l].astype(jnp.float32)
        w2 = params["w2"][l].astype(jnp.float32)

        res = x
        xn = ln(x, params["ln1_g"][l], params["ln1_b"][l])
        qkv = xn @ wqkv + params["bqkv"][l]
        q, k, v = qkv[..., :H], qkv[..., H:2 * H], qkv[..., 2 * H:]
        q = q.reshape(B, S, num_heads, hd).transpose(0, 2, 1, 3)
        k = k.reshape(B, S, num_heads, hd).transpose(0, 2, 1, 3)
        v = v.reshape(B, S, num_heads, hd).transpose(0, 2, 1, 3)
        s = jnp.einsum("bhqd,bhkd->bhqk", q, k) * scale + mask[:, None]
        a = jax.nn.softmax(s, axis=-1)
        ctx = jnp.einsum("bhqk,bhkd->bhqd", a, v).transpose(0, 2, 1, 3).reshape(B, S, H)
        x = ctx @ wo + params["bo"][l] + res

        res = x
        xn = ln(x, params["ln2_g"][l], params["ln2_b"][l])
        h1 = xn @ w1 + params["b1"][l]
        h1 = h1 * jax.nn.sigmoid(1.702 * h1)
        x = h1 @ w2 + params["b2"][l] + res
    return x


# ------------------------------ parameter init ------------------------------

def init_params(key, H, num_layers, mlp_dim):
    # Linear weights stored pre-transposed as [in, out]; matmul weights kept in
    # bf16 (MXU-native), biases / LN params in fp32.
    keys = iter(jax.random.split(key, num_layers * 10))

    def nrm(shape, s=0.02):
        return s * jax.random.normal(next(keys), shape, dtype=jnp.float32)

    wqkv, bqkv, wo, bo = [], [], [], []
    ln1_g, ln1_b, ln2_g, ln2_b = [], [], [], []
    w1, b1, w2, b2 = [], [], [], []
    for _ in range(num_layers):
        wq, wk, wv = nrm((H, H)), nrm((H, H)), nrm((H, H))
        wqkv.append(jnp.concatenate([wq, wk, wv], axis=-1))
        bqkv.append(nrm((1, 3 * H)))
        wo.append(nrm((H, H))); bo.append(nrm((1, H)))
        ln1_g.append(jnp.ones((1, H), jnp.float32))
        ln1_b.append(jnp.zeros((1, H), jnp.float32))
        ln2_g.append(jnp.ones((1, H), jnp.float32))
        ln2_b.append(jnp.zeros((1, H), jnp.float32))
        w1.append(nrm((H, mlp_dim))); b1.append(nrm((1, mlp_dim)))
        w2.append(nrm((mlp_dim, H))); b2.append(nrm((1, H)))

    return {
        "wqkv": jnp.stack(wqkv).astype(jnp.bfloat16),
        "bqkv": jnp.stack(bqkv),
        "wo": jnp.stack(wo).astype(jnp.bfloat16),
        "bo": jnp.stack(bo),
        "ln1_g": jnp.stack(ln1_g), "ln1_b": jnp.stack(ln1_b),
        "ln2_g": jnp.stack(ln2_g), "ln2_b": jnp.stack(ln2_b),
        "w1": jnp.stack(w1).astype(jnp.bfloat16), "b1": jnp.stack(b1),
        "w2": jnp.stack(w2).astype(jnp.bfloat16), "b2": jnp.stack(b2),
    }


# ----------------------------------- main ------------------------------------

if __name__ == "__main__":
    B, S, H = 2, 8, 32
    LAYERS, HEADS, MLP = 2, 4, 64
    # TODO(synk): dropout is omitted (inference / eval mode, dropout_p = 0).

    key = jax.random.PRNGKey(0)
    pkey, xkey = jax.random.split(key)
    params = init_params(pkey, H, LAYERS, MLP)

    x = 0.02 * jax.random.normal(xkey, (B, S, H), dtype=jnp.float32)
    # causal additive mask, broadcast over batch (like torch SDPA attn_mask)
    pos = jnp.arange(S)
    causal = jnp.where(pos[None, :] > pos[:, None],
                       DEFAULT_MASK_VALUE, 0.0).astype(jnp.float32)
    mask = jnp.broadcast_to(causal[None], (B, S, S))

    fwd = jax.jit(lambda xx, mm: encoder_forward(xx, mm, params, HEADS))
    out = fwd(x, mask)
    jax.block_until_ready(out)

    ref = ref_encoder(x, mask, params, HEADS)
    np.testing.assert_allclose(np.asarray(out), np.asarray(ref),
                               rtol=2e-2, atol=2e-2)

    print("KERNEL_OK")
</pallas_src>

<mosaic_0001>
module attributes {stable_mosaic.version = 11 : i64} {
  func.func @encoder_stack_kernel(%arg0: i32, %arg1: i32, %arg2: memref<1x8x32xf32, #tpu.memory_space<vmem>>, %arg3: memref<1x8x8xf32, #tpu.memory_space<vmem>>, %arg4: memref<1x1x32xf32, #tpu.memory_space<vmem>>, %arg5: memref<1x1x32xf32, #tpu.memory_space<vmem>>, %arg6: memref<1x32x96xbf16, #tpu.memory_space<vmem>>, %arg7: memref<1x1x96xf32, #tpu.memory_space<vmem>>, %arg8: memref<1x32x32xbf16, #tpu.memory_space<vmem>>, %arg9: memref<1x1x32xf32, #tpu.memory_space<vmem>>, %arg10: memref<1x1x32xf32, #tpu.memory_space<vmem>>, %arg11: memref<1x1x32xf32, #tpu.memory_space<vmem>>, %arg12: memref<1x32x64xbf16, #tpu.memory_space<vmem>>, %arg13: memref<1x1x64xf32, #tpu.memory_space<vmem>>, %arg14: memref<1x64x32xbf16, #tpu.memory_space<vmem>>, %arg15: memref<1x1x32xf32, #tpu.memory_space<vmem>>, %arg16: memref<1x8x32xf32, #tpu.memory_space<vmem>>, %arg17: memref<1x8x32xf32, #tpu.memory_space<vmem>>) attributes {dimension_semantics = [#tpu.dimension_semantics<parallel>, #tpu.dimension_semantics<arbitrary>], iteration_bounds = array<i64: 2, 2>, scalar_prefetch = 0 : i64, scratch_operands = 1 : i64, tpu.core_type = #tpu.core_type<tc>, window_params = [{transform_indices = @transform_0, window_bounds = array<i64: 1, 8, 32>}, {transform_indices = @transform_1, window_bounds = array<i64: 1, 8, 8>}, {transform_indices = @transform_2, window_bounds = array<i64: 1, 1, 32>}, {transform_indices = @transform_3, window_bounds = array<i64: 1, 1, 32>}, {transform_indices = @transform_4, window_bounds = array<i64: 1, 32, 96>}, {transform_indices = @transform_5, window_bounds = array<i64: 1, 1, 96>}, {transform_indices = @transform_6, window_bounds = array<i64: 1, 32, 32>}, {transform_indices = @transform_7, window_bounds = array<i64: 1, 1, 32>}, {transform_indices = @transform_8, window_bounds = array<i64: 1, 1, 32>}, {transform_indices = @transform_9, window_bounds = array<i64: 1, 1, 32>}, {transform_indices = @transform_10, window_bounds = array<i64: 1, 32, 64>}, {transform_indices = @transform_11, window_bounds = array<i64: 1, 1, 64>}, {transform_indices = @transform_12, window_bounds = array<i64: 1, 64, 32>}, {transform_indices = @transform_13, window_bounds = array<i64: 1, 1, 32>}, {transform_indices = @transform_14, window_bounds = array<i64: 1, 8, 32>}]} {
    %c0_i32 = arith.constant 0 : i32
    %0 = arith.cmpi eq, %arg1, %c0_i32 : i32
    %1 = arith.extui %0 : i1 to i32
    %c0_i32_0 = arith.constant 0 : i32
    %2 = arith.cmpi ne, %1, %c0_i32_0 : i32
    scf.if %2 {
      %c0_79 = arith.constant 0 : index
      %c0_80 = arith.constant 0 : index
      %c0_81 = arith.constant 0 : index
      %190 = vector.load %arg2[%c0_79, %c0_80, %c0_81] : memref<1x8x32xf32, #tpu.memory_space<vmem>>, vector<1x8x32xf32>
      %c0_82 = arith.constant 0 : index
      %c0_83 = arith.constant 0 : index
      %c0_84 = arith.constant 0 : index
      %191 = vector.load %arg17[%c0_82, %c0_83, %c0_84] : memref<1x8x32xf32, #tpu.memory_space<vmem>>, vector<1x8x32xf32>
      tpu.vector_store %arg17[%c0_82, %c0_83, %c0_84], %190 {strides = array<i32>} : memref<1x8x32xf32, #tpu.memory_space<vmem>>, vector<1x8x32xf32>,
    } else {
    }
    %c0 = arith.constant 0 : index
    %c0_1 = arith.constant 0 : index
    %c0_2 = arith.constant 0 : index
    %3 = vector.load %arg17[%c0, %c0_1, %c0_2] : memref<1x8x32xf32, #tpu.memory_space<vmem>>, vector<1x8x32xf32>
    %c0_3 = arith.constant 0 : index
    %c0_4 = arith.constant 0 : index
    %c0_5 = arith.constant 0 : index
    %4 = vector.load %arg3[%c0_3, %c0_4, %c0_5] : memref<1x8x8xf32, #tpu.memory_space<vmem>>, vector<1x8x8xf32>
    %c0_6 = arith.constant 0 : index
    %c0_7 = arith.constant 0 : index
    %c0_8 = arith.constant 0 : index
    %5 = vector.load %arg4[%c0_6, %c0_7, %c0_8] : memref<1x1x32xf32, #tpu.memory_space<vmem>>, vector<1x1x32xf32>
    %6 = vector.shape_cast %5 : vector<1x1x32xf32> to vector<1x32xf32>
    %c0_9 = arith.constant 0 : index
    %c0_10 = arith.constant 0 : index
    %c0_11 = arith.constant 0 : index
    %7 = vector.load %arg5[%c0_9, %c0_10, %c0_11] : memref<1x1x32xf32, #tpu.memory_space<vmem>>, vector<1x1x32xf32>
    %8 = vector.shape_cast %7 : vector<1x1x32xf32> to vector<1x32xf32>
    %cst = arith.constant dense<0.000000e+00> : vector<1x8xf32>
    %9 = vector.multi_reduction <add>, %3, %cst [2] : vector<1x8x32xf32> to vector<1x8xf32>
    %10 = vector.shape_cast %9 : vector<1x8xf32> to vector<1x8x1xf32>
    %cst_12 = arith.constant 3.200000e+01 : f32
    %11 = vector.broadcast %cst_12 : f32 to vector<1x8x1xf32>
    %12 = arith.divf %10, %11 : vector<1x8x1xf32>
    %13 = vector.broadcast %12 : vector<1x8x1xf32> to vector<1x8x32xf32>
    %14 = arith.subf %3, %13 : vector<1x8x32xf32>
    %15 = arith.mulf %14, %14 : vector<1x8x32xf32>
    %cst_13 = arith.constant dense<0.000000e+00> : vector<1x8xf32>
    %16 = vector.multi_reduction <add>, %15, %cst_13 [2] : vector<1x8x32xf32> to vector<1x8xf32>
    %17 = vector.shape_cast %16 : vector<1x8xf32> to vector<1x8x1xf32>
    %cst_14 = arith.constant 3.200000e+01 : f32
    %18 = vector.broadcast %cst_14 : f32 to vector<1x8x1xf32>
    %19 = arith.divf %17, %18 : vector<1x8x1xf32>
    %20 = vector.broadcast %12 : vector<1x8x1xf32> to vector<1x8x32xf32>
    %21 = arith.subf %3, %20 : vector<1x8x32xf32>
    %cst_15 = arith.constant 9.99999974E-6 : f32
    %22 = vector.broadcast %cst_15 : f32 to vector<1x8x1xf32>
    %23 = arith.addf %19, %22 : vector<1x8x1xf32>
    %24 = math.rsqrt %23 : vector<1x8x1xf32>
    %25 = vector.broadcast %24 : vector<1x8x1xf32> to vector<1x8x32xf32>
    %26 = arith.mulf %21, %25 : vector<1x8x32xf32>
    %27 = vector.shape_cast %6 : vector<1x32xf32> to vector<1x1x32xf32>
    %28 = vector.broadcast %27 : vector<1x1x32xf32> to vector<1x8x32xf32>
    %29 = arith.mulf %26, %28 : vector<1x8x32xf32>
    %30 = vector.shape_cast %8 : vector<1x32xf32> to vector<1x1x32xf32>
    %31 = vector.broadcast %30 : vector<1x1x32xf32> to vector<1x8x32xf32>
    %32 = arith.addf %29, %31 : vector<1x8x32xf32>
    %33 = vector.shape_cast %32 : vector<1x8x32xf32> to vector<8x32xf32>
    %34 = arith.truncf %33 : vector<8x32xf32> to vector<8x32xbf16>
    %c0_16 = arith.constant 0 : index
    %c0_17 = arith.constant 0 : index
    %c0_18 = arith.constant 0 : index
    %35 = vector.load %arg6[%c0_16, %c0_17, %c0_18] : memref<1x32x96xbf16, #tpu.memory_space<vmem>>, vector<1x32x96xbf16>
    %36 = vector.shape_cast %35 : vector<1x32x96xbf16> to vector<32x96xbf16>
    %cst_19 = arith.constant dense<0.000000e+00> : vector<8x96xf32>
    %37 = tpu.matmul %34, %36, %cst_19 {dimension_numbers = #tpu.dot_dimension_numbers<[1], [0], [0], [1], [0, 0, 1, 1], [], []>} : vector<8x32xbf16>, vector<32x96xbf16>, vector<8x96xf32> -> vector<8x96xf32>
    %c0_20 = arith.constant 0 : index
    %c0_21 = arith.constant 0 : index
    %c0_22 = arith.constant 0 : index
    %38 = vector.load %arg7[%c0_20, %c0_21, %c0_22] : memref<1x1x96xf32, #tpu.memory_space<vmem>>, vector<1x1x96xf32>
    %39 = vector.shape_cast %38 : vector<1x1x96xf32> to vector<1x96xf32>
    %40 = vector.broadcast %39 : vector<1x96xf32> to vector<8x96xf32>
    %41 = arith.addf %37, %40 : vector<8x96xf32>
    %42 = vector.shape_cast %41 : vector<8x96xf32> to vector<1x8x96xf32>
    %43 = vector.extract_strided_slice %42 {offsets = [0, 0, 0], sizes = [1, 8, 32], strides = [1, 1, 1]} : vector<1x8x96xf32> to vector<1x8x32xf32>
    %cst_23 = arith.constant 0.353553385 : f32
    %44 = vector.broadcast %cst_23 : f32 to vector<1x8x32xf32>
    %45 = arith.mulf %43, %44 : vector<1x8x32xf32>
    %46 = vector.extract_strided_slice %42 {offsets = [0, 0, 32], sizes = [1, 8, 32], strides = [1, 1, 1]} : vector<1x8x96xf32> to vector<1x8x32xf32>
    %47 = vector.extract_strided_slice %42 {offsets = [0, 0, 64], sizes = [1, 8, 32], strides = [1, 1, 1]} : vector<1x8x96xf32> to vector<1x8x32xf32>
    %48 = arith.truncf %45 : vector<1x8x32xf32> to vector<1x8x32xbf16>
    %49 = arith.truncf %46 : vector<1x8x32xf32> to vector<1x8x32xbf16>
    %50 = arith.truncf %47 : vector<1x8x32xf32> to vector<1x8x32xbf16>
    %51 = vector.extract_strided_slice %48 {offsets = [0, 0, 0], sizes = [1, 8, 8], strides = [1, 1, 1]} : vector<1x8x32xbf16> to vector<1x8x8xbf16>
    %52 = vector.extract_strided_slice %49 {offsets = [0, 0, 0], sizes = [1, 8, 8], strides = [1, 1, 1]} : vector<1x8x32xbf16> to vector<1x8x8xbf16>
    "tpu.trace_start"() <{level = 10 : i32, message = "bqd,bkd->bqk"}> : () -> ()
    %cst_24 = arith.constant dense<0.000000e+00> : vector<1x8x8xf32>
    %53 = tpu.matmul %51, %52, %cst_24 {dimension_numbers = #tpu.dot_dimension_numbers<[2], [2], [1], [1], [0, 0, 0, 1, 1, 1], [0], [0]>} : vector<1x8x8xbf16>, vector<1x8x8xbf16>, vector<1x8x8xf32> -> vector<1x8x8xf32>
    "tpu.trace_stop"() : () -> ()
    %54 = arith.addf %53, %4 : vector<1x8x8xf32>
    %cst_25 = arith.constant dense<0xFF800000> : vector<1x8xf32>
    %55 = vector.multi_reduction <maximumf>, %54, %cst_25 [2] : vector<1x8x8xf32> to vector<1x8xf32>
    %56 = vector.shape_cast %55 : vector<1x8xf32> to vector<1x8x1xf32>
    %57 = vector.broadcast %56 : vector<1x8x1xf32> to vector<1x8x8xf32>
    %58 = arith.subf %54, %57 : vector<1x8x8xf32>
    %59 = math.exp %58 : vector<1x8x8xf32>
    %cst_26 = arith.constant dense<0.000000e+00> : vector<1x8xf32>
    %60 = vector.multi_reduction <add>, %59, %cst_26 [2] : vector<1x8x8xf32> to vector<1x8xf32>
    %61 = vector.shape_cast %60 : vector<1x8xf32> to vector<1x8x1xf32>
    %62 = tpu.reciprocal %61 {approx = true} : vector<1x8x1xf32> -> vector<1x8x1xf32>
    %63 = vector.broadcast %62 : vector<1x8x1xf32> to vector<1x8x8xf32>
    %64 = arith.mulf %59, %63 : vector<1x8x8xf32>
    %65 = arith.truncf %64 : vector<1x8x8xf32> to vector<1x8x8xbf16>
    %66 = vector.extract_strided_slice %50 {offsets = [0, 0, 0], sizes = [1, 8, 8], strides = [1, 1, 1]} : vector<1x8x32xbf16> to vector<1x8x8xbf16>
    "tpu.trace_start"() <{level = 10 : i32, message = "bqk,bkd->bqd"}> : () -> ()
    %cst_27 = arith.constant dense<0.000000e+00> : vector<1x8x8xf32>
    %67 = tpu.matmul %65, %66, %cst_27 {dimension_numbers = #tpu.dot_dimension_numbers<[2], [1], [1], [2], [0, 0, 0, 1, 1, 2], [0], [0]>} : vector<1x8x8xbf16>, vector<1x8x8xbf16>, vector<1x8x8xf32> -> vector<1x8x8xf32>
    "tpu.trace_stop"() : () -> ()
    %68 = vector.extract_strided_slice %48 {offsets = [0, 0, 8], sizes = [1, 8, 8], strides = [1, 1, 1]} : vector<1x8x32xbf16> to vector<1x8x8xbf16>
    %69 = vector.extract_strided_slice %49 {offsets = [0, 0, 8], sizes = [1, 8, 8], strides = [1, 1, 1]} : vector<1x8x32xbf16> to vector<1x8x8xbf16>
    "tpu.trace_start"() <{level = 10 : i32, message = "bqd,bkd->bqk"}> : () -> ()
    %cst_28 = arith.constant dense<0.000000e+00> : vector<1x8x8xf32>
    %70 = tpu.matmul %68, %69, %cst_28 {dimension_numbers = #tpu.dot_dimension_numbers<[2], [2], [1], [1], [0, 0, 0, 1, 1, 1], [0], [0]>} : vector<1x8x8xbf16>, vector<1x8x8xbf16>, vector<1x8x8xf32> -> vector<1x8x8xf32>
    "tpu.trace_stop"() : () -> ()
    %71 = arith.addf %70, %4 : vector<1x8x8xf32>
    %cst_29 = arith.constant dense<0xFF800000> : vector<1x8xf32>
    %72 = vector.multi_reduction <maximumf>, %71, %cst_29 [2] : vector<1x8x8xf32> to vector<1x8xf32>
    %73 = vector.shape_cast %72 : vector<1x8xf32> to vector<1x8x1xf32>
    %74 = vector.broadcast %73 : vector<1x8x1xf32> to vector<1x8x8xf32>
    %75 = arith.subf %71, %74 : vector<1x8x8xf32>
    %76 = math.exp %75 : vector<1x8x8xf32>
    %cst_30 = arith.constant dense<0.000000e+00> : vector<1x8xf32>
    %77 = vector.multi_reduction <add>, %76, %cst_30 [2] : vector<1x8x8xf32> to vector<1x8xf32>
    %78 = vector.shape_cast %77 : vector<1x8xf32> to vector<1x8x1xf32>
    %79 = tpu.reciprocal %78 {approx = true} : vector<1x8x1xf32> -> vector<1x8x1xf32>
    %80 = vector.broadcast %79 : vector<1x8x1xf32> to vector<1x8x8xf32>
    %81 = arith.mulf %76, %80 : vector<1x8x8xf32>
    %82 = arith.truncf %81 : vector<1x8x8xf32> to vector<1x8x8xbf16>
    %83 = vector.extract_strided_slice %50 {offsets = [0, 0, 8], sizes = [1, 8, 8], strides = [1, 1, 1]} : vector<1x8x32xbf16> to vector<1x8x8xbf16>
    "tpu.trace_start"() <{level = 10 : i32, message = "bqk,bkd->bqd"}> : () -> ()
    %cst_31 = arith.constant dense<0.000000e+00> : vector<1x8x8xf32>
    %84 = tpu.matmul %82, %83, %cst_31 {dimension_numbers = #tpu.dot_dimension_numbers<[2], [1], [1], [2], [0, 0, 0, 1, 1, 2], [0], [0]>} : vector<1x8x8xbf16>, vector<1x8x8xbf16>, vector<1x8x8xf32> -> vector<1x8x8xf32>
    "tpu.trace_stop"() : () -> ()
    %85 = vector.extract_strided_slice %48 {offsets = [0, 0, 16], sizes = [1, 8, 8], strides = [1, 1, 1]} : vector<1x8x32xbf16> to vector<1x8x8xbf16>
    %86 = vector.extract_strided_slice %49 {offsets = [0, 0, 16], sizes = [1, 8, 8], strides = [1, 1, 1]} : vector<1x8x32xbf16> to vector<1x8x8xbf16>
    "tpu.trace_start"() <{level = 10 : i32, message = "bqd,bkd->bqk"}> : () -> ()
    %cst_32 = arith.constant dense<0.000000e+00> : vector<1x8x8xf32>
    %87 = tpu.matmul %85, %86, %cst_32 {dimension_numbers = #tpu.dot_dimension_numbers<[2], [2], [1], [1], [0, 0, 0, 1, 1, 1], [0], [0]>} : vector<1x8x8xbf16>, vector<1x8x8xbf16>, vector<1x8x8xf32> -> vector<1x8x8xf32>
    "tpu.trace_stop"() : () -> ()
    %88 = arith.addf %87, %4 : vector<1x8x8xf32>
    %cst_33 = arith.constant dense<0xFF800000> : vector<1x8xf32>
    %89 = vector.multi_reduction <maximumf>, %88, %cst_33 [2] : vector<1x8x8xf32> to vector<1x8xf32>
    %90 = vector.shape_cast %89 : vector<1x8xf32> to vector<1x8x1xf32>
    %91 = vector.broadcast %90 : vector<1x8x1xf32> to vector<1x8x8xf32>
    %92 = arith.subf %88, %91 : vector<1x8x8xf32>
    %93 = math.exp %92 : vector<1x8x8xf32>
    %cst_34 = arith.constant dense<0.000000e+00> : vector<1x8xf32>
    %94 = vector.multi_reduction <add>, %93, %cst_34 [2] : vector<1x8x8xf32> to vector<1x8xf32>
    %95 = vector.shape_cast %94 : vector<1x8xf32> to vector<1x8x1xf32>
    %96 = tpu.reciprocal %95 {approx = true} : vector<1x8x1xf32> -> vector<1x8x1xf32>
    %97 = vector.broadcast %96 : vector<1x8x1xf32> to vector<1x8x8xf32>
    %98 = arith.mulf %93, %97 : vector<1x8x8xf32>
    %99 = arith.truncf %98 : vector<1x8x8xf32> to vector<1x8x8xbf16>
    %100 = vector.extract_strided_slice %50 {offsets = [0, 0, 16], sizes = [1, 8, 8], strides = [1, 1, 1]} : vector<1x8x32xbf16> to vector<1x8x8xbf16>
    "tpu.trace_start"() <{level = 10 : i32, message = "bqk,bkd->bqd"}> : () -> ()
    %cst_35 = arith.constant dense<0.000000e+00> : vector<1x8x8xf32>
    %101 = tpu.matmul %99, %100, %cst_35 {dimension_numbers = #tpu.dot_dimension_numbers<[2], [1], [1], [2], [0, 0, 0, 1, 1, 2], [0], [0]>} : vector<1x8x8xbf16>, vector<1x8x8xbf16>, vector<1x8x8xf32> -> vector<1x8x8xf32>
    "tpu.trace_stop"() : () -> ()
    %102 = vector.extract_strided_slice %48 {offsets = [0, 0, 24], sizes = [1, 8, 8], strides = [1, 1, 1]} : vector<1x8x32xbf16> to vector<1x8x8xbf16>
    %103 = vector.extract_strided_slice %49 {offsets = [0, 0, 24], sizes = [1, 8, 8], strides = [1, 1, 1]} : vector<1x8x32xbf16> to vector<1x8x8xbf16>
    "tpu.trace_start"() <{level = 10 : i32, message = "bqd,bkd->bqk"}> : () -> ()
    %cst_36 = arith.constant dense<0.000000e+00> : vector<1x8x8xf32>
    %104 = tpu.matmul %102, %103, %cst_36 {dimension_numbers = #tpu.dot_dimension_numbers<[2], [2], [1], [1], [0, 0, 0, 1, 1, 1], [0], [0]>} : vector<1x8x8xbf16>, vector<1x8x8xbf16>, vector<1x8x8xf32> -> vector<1x8x8xf32>
    "tpu.trace_stop"() : () -> ()
    %105 = arith.addf %104, %4 : vector<1x8x8xf32>
    %cst_37 = arith.constant dense<0xFF800000> : vector<1x8xf32>
    %106 = vector.multi_reduction <maximumf>, %105, %cst_37 [2] : vector<1x8x8xf32> to vector<1x8xf32>
    %107 = vector.shape_cast %106 : vector<1x8xf32> to vector<1x8x1xf32>
    %108 = vector.broadcast %107 : vector<1x8x1xf32> to vector<1x8x8xf32>
    %109 = arith.subf %105, %108 : vector<1x8x8xf32>
    %110 = math.exp %109 : vector<1x8x8xf32>
    %cst_38 = arith.constant dense<0.000000e+00> : vector<1x8xf32>
    %111 = vector.multi_reduction <add>, %110, %cst_38 [2] : vector<1x8x8xf32> to vector<1x8xf32>
    %112 = vector.shape_cast %111 : vector<1x8xf32> to vector<1x8x1xf32>
    %113 = tpu.reciprocal %112 {approx = true} : vector<1x8x1xf32> -> vector<1x8x1xf32>
    %114 = vector.broadcast %113 : vector<1x8x1xf32> to vector<1x8x8xf32>
    %115 = arith.mulf %110, %114 : vector<1x8x8xf32>
    %116 = arith.truncf %115 : vector<1x8x8xf32> to vector<1x8x8xbf16>
    %117 = vector.extract_strided_slice %50 {offsets = [0, 0, 24], sizes = [1, 8, 8], strides = [1, 1, 1]} : vector<1x8x32xbf16> to vector<1x8x8xbf16>
    "tpu.trace_start"() <{level = 10 : i32, message = "bqk,bkd->bqd"}> : () -> ()
    %cst_39 = arith.constant dense<0.000000e+00> : vector<1x8x8xf32>
    %118 = tpu.matmul %116, %117, %cst_39 {dimension_numbers = #tpu.dot_dimension_numbers<[2], [1], [1], [2], [0, 0, 0, 1, 1, 2], [0], [0]>} : vector<1x8x8xbf16>, vector<1x8x8xbf16>, vector<1x8x8xf32> -> vector<1x8x8xf32>
    "tpu.trace_stop"() : () -> ()
    %119 = tpu.concatenate %67, %84, %101, %118 in 2 : vector<1x8x8xf32>, vector<1x8x8xf32>, vector<1x8x8xf32>, vector<1x8x8xf32> -> vector<1x8x32xf32>
    %120 = vector.shape_cast %119 : vector<1x8x32xf32> to vector<8x32xf32>
    %121 = arith.truncf %120 : vector<8x32xf32> to vector<8x32xbf16>
    %c0_40 = arith.constant 0 : index
    %c0_41 = arith.constant 0 : index
    %c0_42 = arith.constant 0 : index
    %122 = vector.load %arg8[%c0_40, %c0_41, %c0_42] : memref<1x32x32xbf16, #tpu.memory_space<vmem>>, vector<1x32x32xbf16>
    %123 = vector.shape_cast %122 : vector<1x32x32xbf16> to vector<32x32xbf16>
    %cst_43 = arith.constant dense<0.000000e+00> : vector<8x32xf32>
    %124 = tpu.matmul %121, %123, %cst_43 {dimension_numbers = #tpu.dot_dimension_numbers<[1], [0], [0], [1], [0, 0, 1, 1], [], []>} : vector<8x32xbf16>, vector<32x32xbf16>, vector<8x32xf32> -> vector<8x32xf32>
    %c0_44 = arith.constant 0 : index
    %c0_45 = arith.constant 0 : index
    %c0_46 = arith.constant 0 : index
    %125 = vector.load %arg9[%c0_44, %c0_45, %c0_46] : memref<1x1x32xf32, #tpu.memory_space<vmem>>, vector<1x1x32xf32>
    %126 = vector.shape_cast %125 : vector<1x1x32xf32> to vector<1x32xf32>
    %127 = vector.broadcast %126 : vector<1x32xf32> to vector<8x32xf32>
    %128 = arith.addf %124, %127 : vector<8x32xf32>
    %129 = vector.shape_cast %128 : vector<8x32xf32> to vector<1x8x32xf32>
    %130 = arith.addf %3, %129 : vector<1x8x32xf32>
    %c0_47 = arith.constant 0 : index
    %c0_48 = arith.constant 0 : index
    %c0_49 = arith.constant 0 : index
    %131 = vector.load %arg10[%c0_47, %c0_48, %c0_49] : memref<1x1x32xf32, #tpu.memory_space<vmem>>, vector<1x1x32xf32>
    %132 = vector.shape_cast %131 : vector<1x1x32xf32> to vector<1x32xf32>
    %c0_50 = arith.constant 0 : index
    %c0_51 = arith.constant 0 : index
    %c0_52 = arith.constant 0 : index
    %133 = vector.load %arg11[%c0_50, %c0_51, %c0_52] : memref<1x1x32xf32, #tpu.memory_space<vmem>>, vector<1x1x32xf32>
    %134 = vector.shape_cast %133 : vector<1x1x32xf32> to vector<1x32xf32>
    %cst_53 = arith.constant dense<0.000000e+00> : vector<1x8xf32>
    %135 = vector.multi_reduction <add>, %130, %cst_53 [2] : vector<1x8x32xf32> to vector<1x8xf32>
    %136 = vector.shape_cast %135 : vector<1x8xf32> to vector<1x8x1xf32>
    %cst_54 = arith.constant 3.200000e+01 : f32
    %137 = vector.broadcast %cst_54 : f32 to vector<1x8x1xf32>
    %138 = arith.divf %136, %137 : vector<1x8x1xf32>
    %139 = vector.broadcast %138 : vector<1x8x1xf32> to vector<1x8x32xf32>
    %140 = arith.subf %130, %139 : vector<1x8x32xf32>
    %141 = arith.mulf %140, %140 : vector<1x8x32xf32>
    %cst_55 = arith.constant dense<0.000000e+00> : vector<1x8xf32>
    %142 = vector.multi_reduction <add>, %141, %cst_55 [2] : vector<1x8x32xf32> to vector<1x8xf32>
    %143 = vector.shape_cast %142 : vector<1x8xf32> to vector<1x8x1xf32>
    %cst_56 = arith.constant 3.200000e+01 : f32
    %144 = vector.broadcast %cst_56 : f32 to vector<1x8x1xf32>
    %145 = arith.divf %143, %144 : vector<1x8x1xf32>
    %146 = vector.broadcast %138 : vector<1x8x1xf32> to vector<1x8x32xf32>
    %147 = arith.subf %130, %146 : vector<1x8x32xf32>
    %cst_57 = arith.constant 9.99999974E-6 : f32
    %148 = vector.broadcast %cst_57 : f32 to vector<1x8x1xf32>
    %149 = arith.addf %145, %148 : vector<1x8x1xf32>
    %150 = math.rsqrt %149 : vector<1x8x1xf32>
    %151 = vector.broadcast %150 : vector<1x8x1xf32> to vector<1x8x32xf32>
    %152 = arith.mulf %147, %151 : vector<1x8x32xf32>
    %153 = vector.shape_cast %132 : vector<1x32xf32> to vector<1x1x32xf32>
    %154 = vector.broadcast %153 : vector<1x1x32xf32> to vector<1x8x32xf32>
    %155 = arith.mulf %152, %154 : vector<1x8x32xf32>
    %156 = vector.shape_cast %134 : vector<1x32xf32> to vector<1x1x32xf32>
    %157 = vector.broadcast %156 : vector<1x1x32xf32> to vector<1x8x32xf32>
    %158 = arith.addf %155, %157 : vector<1x8x32xf32>
    %159 = vector.shape_cast %158 : vector<1x8x32xf32> to vector<8x32xf32>
    %160 = arith.truncf %159 : vector<8x32xf32> to vector<8x32xbf16>
    %c0_58 = arith.constant 0 : index
    %c0_59 = arith.constant 0 : index
    %c0_60 = arith.constant 0 : index
    %161 = vector.load %arg12[%c0_58, %c0_59, %c0_60] : memref<1x32x64xbf16, #tpu.memory_space<vmem>>, vector<1x32x64xbf16>
    %162 = vector.shape_cast %161 : vector<1x32x64xbf16> to vector<32x64xbf16>
    %cst_61 = arith.constant dense<0.000000e+00> : vector<8x64xf32>
    %163 = tpu.matmul %160, %162, %cst_61 {dimension_numbers = #tpu.dot_dimension_numbers<[1], [0], [0], [1], [0, 0, 1, 1], [], []>} : vector<8x32xbf16>, vector<32x64xbf16>, vector<8x64xf32> -> vector<8x64xf32>
    %c0_62 = arith.constant 0 : index
    %c0_63 = arith.constant 0 : index
    %c0_64 = arith.constant 0 : index
    %164 = vector.load %arg13[%c0_62, %c0_63, %c0_64] : memref<1x1x64xf32, #tpu.memory_space<vmem>>, vector<1x1x64xf32>
    %165 = vector.shape_cast %164 : vector<1x1x64xf32> to vector<1x64xf32>
    %166 = vector.broadcast %165 : vector<1x64xf32> to vector<8x64xf32>
    %167 = arith.addf %163, %166 : vector<8x64xf32>
    %cst_65 = arith.constant -1.702000e+00 : f32
    %168 = vector.broadcast %cst_65 : f32 to vector<8x64xf32>
    %169 = arith.mulf %168, %167 : vector<8x64xf32>
    %170 = math.exp %169 : vector<8x64xf32>
    %cst_66 = arith.constant 1.000000e+00 : f32
    %171 = vector.broadcast %cst_66 : f32 to vector<8x64xf32>
    %172 = arith.addf %171, %170 : vector<8x64xf32>
    %cst_67 = arith.constant 1.000000e+00 : f32
    %173 = vector.broadcast %cst_67 : f32 to vector<8x64xf32>
    %174 = arith.divf %173, %172 : vector<8x64xf32>
    %175 = arith.mulf %167, %174 : vector<8x64xf32>
    %176 = arith.truncf %175 : vector<8x64xf32> to vector<8x64xbf16>
    %c0_68 = arith.constant 0 : index
    %c0_69 = arith.constant 0 : index
    %c0_70 = arith.constant 0 : index
    %177 = vector.load %arg14[%c0_68, %c0_69, %c0_70] : memref<1x64x32xbf16, #tpu.memory_space<vmem>>, vector<1x64x32xbf16>
    %178 = vector.shape_cast %177 : vector<1x64x32xbf16> to vector<64x32xbf16>
    %cst_71 = arith.constant dense<0.000000e+00> : vector<8x32xf32>
    %179 = tpu.matmul %176, %178, %cst_71 {dimension_numbers = #tpu.dot_dimension_numbers<[1], [0], [0], [1], [0, 0, 1, 1], [], []>} : vector<8x64xbf16>, vector<64x32xbf16>, vector<8x32xf32> -> vector<8x32xf32>
    %c0_72 = arith.constant 0 : index
    %c0_73 = arith.constant 0 : index
    %c0_74 = arith.constant 0 : index
    %180 = vector.load %arg15[%c0_72, %c0_73, %c0_74] : memref<1x1x32xf32, #tpu.memory_space<vmem>>, vector<1x1x32xf32>
    %181 = vector.shape_cast %180 : vector<1x1x32xf32> to vector<1x32xf32>
    %182 = vector.broadcast %181 : vector<1x32xf32> to vector<8x32xf32>
    %183 = arith.addf %179, %182 : vector<8x32xf32>
    %184 = vector.shape_cast %183 : vector<8x32xf32> to vector<1x8x32xf32>
    %185 = arith.addf %130, %184 : vector<1x8x32xf32>
    %c0_75 = arith.constant 0 : index
    %c0_76 = arith.constant 0 : index
    %c0_77 = arith.constant 0 : index
    %186 = vector.load %arg17[%c0_75, %c0_76, %c0_77] : memref<1x8x32xf32, #tpu.memory_space<vmem>>, vector<1x8x32xf32>
    tpu.vector_store %arg17[%c0_75, %c0_76, %c0_77], %185 {strides = array<i32>} : memref<1x8x32xf32, #tpu.memory_space<vmem>>, vector<1x8x32xf32>,
    %c1_i32 = arith.constant 1 : i32
    %187 = arith.cmpi eq, %arg1, %c1_i32 : i32
    %188 = arith.extui %187 : i1 to i32
    %c0_i32_78 = arith.constant 0 : i32
    %189 = arith.cmpi ne, %188, %c0_i32_78 : i32
    scf.if %189 {
      %c0_79 = arith.constant 0 : index
      %c0_80 = arith.constant 0 : index
      %c0_81 = arith.constant 0 : index
      %190 = vector.load %arg17[%c0_79, %c0_80, %c0_81] : memref<1x8x32xf32, #tpu.memory_space<vmem>>, vector<1x8x32xf32>
      %c0_82 = arith.constant 0 : index
      %c0_83 = arith.constant 0 : index
      %c0_84 = arith.constant 0 : index
      %191 = vector.load %arg16[%c0_82, %c0_83, %c0_84] : memref<1x8x32xf32, #tpu.memory_space<vmem>>, vector<1x8x32xf32>
      tpu.vector_store %arg16[%c0_82, %c0_83, %c0_84], %190 {strides = array<i32>} : memref<1x8x32xf32, #tpu.memory_space<vmem>>, vector<1x8x32xf32>,
    } else {
    }
    return
  }
  func.func @transform_0(%arg0: i32, %arg1: i32) -> (i32, i32, i32) {
    %c0_i32 = arith.constant 0 : i32
    %c0_i32_0 = arith.constant 0 : i32
    %c0_i32_1 = arith.constant 0 : i32
    return %arg0, %c0_i32, %c0_i32_0 : i32, i32, i32
  }
  func.func @transform_1(%arg0: i32, %arg1: i32) -> (i32, i32, i32) {
    %c0_i32 = arith.constant 0 : i32
    %c0_i32_0 = arith.constant 0 : i32
    %c0_i32_1 = arith.constant 0 : i32
    return %arg0, %c0_i32, %c0_i32_0 : i32, i32, i32
  }
  func.func @transform_2(%arg0: i32, %arg1: i32) -> (i32, i32, i32) {
    %c0_i32 = arith.constant 0 : i32
    %c0_i32_0 = arith.constant 0 : i32
    %c0_i32_1 = arith.constant 0 : i32
    return %arg1, %c0_i32, %c0_i32_0 : i32, i32, i32
  }
  func.func @transform_3(%arg0: i32, %arg1: i32) -> (i32, i32, i32) {
    %c0_i32 = arith.constant 0 : i32
    %c0_i32_0 = arith.constant 0 : i32
    %c0_i32_1 = arith.constant 0 : i32
    return %arg1, %c0_i32, %c0_i32_0 : i32, i32, i32
  }
  func.func @transform_4(%arg0: i32, %arg1: i32) -> (i32, i32, i32) {
    %c0_i32 = arith.constant 0 : i32
    %c0_i32_0 = arith.constant 0 : i32
    %c0_i32_1 = arith.constant 0 : i32
    return %arg1, %c0_i32, %c0_i32_0 : i32, i32, i32
  }
  func.func @transform_5(%arg0: i32, %arg1: i32) -> (i32, i32, i32) {
    %c0_i32 = arith.constant 0 : i32
    %c0_i32_0 = arith.constant 0 : i32
    %c0_i32_1 = arith.constant 0 : i32
    return %arg1, %c0_i32, %c0_i32_0 : i32, i32, i32
  }
  func.func @transform_6(%arg0: i32, %arg1: i32) -> (i32, i32, i32) {
    %c0_i32 = arith.constant 0 : i32
    %c0_i32_0 = arith.constant 0 : i32
    %c0_i32_1 = arith.constant 0 : i32
    return %arg1, %c0_i32, %c0_i32_0 : i32, i32, i32
  }
  func.func @transform_7(%arg0: i32, %arg1: i32) -> (i32, i32, i32) {
    %c0_i32 = arith.constant 0 : i32
    %c0_i32_0 = arith.constant 0 : i32
    %c0_i32_1 = arith.constant 0 : i32
    return %arg1, %c0_i32, %c0_i32_0 : i32, i32, i32
  }
  func.func @transform_8(%arg0: i32, %arg1: i32) -> (i32, i32, i32) {
    %c0_i32 = arith.constant 0 : i32
    %c0_i32_0 = arith.constant 0 : i32
    %c0_i32_1 = arith.constant 0 : i32
    return %arg1, %c0_i32, %c0_i32_0 : i32, i32, i32
  }
  func.func @transform_9(%arg0: i32, %arg1: i32) -> (i32, i32, i32) {
    %c0_i32 = arith.constant 0 : i32
    %c0_i32_0 = arith.constant 0 : i32
    %c0_i32_1 = arith.constant 0 : i32
    return %arg1, %c0_i32, %c0_i32_0 : i32, i32, i32
  }
  func.func @transform_10(%arg0: i32, %arg1: i32) -> (i32, i32, i32) {
    %c0_i32 = arith.constant 0 : i32
    %c0_i32_0 = arith.constant 0 : i32
    %c0_i32_1 = arith.constant 0 : i32
    return %arg1, %c0_i32, %c0_i32_0 : i32, i32, i32
  }
  func.func @transform_11(%arg0: i32, %arg1: i32) -> (i32, i32, i32) {
    %c0_i32 = arith.constant 0 : i32
    %c0_i32_0 = arith.constant 0 : i32
    %c0_i32_1 = arith.constant 0 : i32
    return %arg1, %c0_i32, %c0_i32_0 : i32, i32, i32
  }
  func.func @transform_12(%arg0: i32, %arg1: i32) -> (i32, i32, i32) {
    %c0_i32 = arith.constant 0 : i32
    %c0_i32_0 = arith.constant 0 : i32
    %c0_i32_1 = arith.constant 0 : i32
    return %arg1, %c0_i32, %c0_i32_0 : i32, i32, i32
  }
  func.func @transform_13(%arg0: i32, %arg1: i32) -> (i32, i32, i32) {
    %c0_i32 = arith.constant 0 : i32
    %c0_i32_0 = arith.constant 0 : i32
    %c0_i32_1 = arith.constant 0 : i32
    return %arg1, %c0_i32, %c0_i32_0 : i32, i32, i32
  }
  func.func @transform_14(%arg0: i32, %arg1: i32) -> (i32, i32, i32) {
    %c0_i32 = arith.constant 0 : i32
    %c0_i32_0 = arith.constant 0 : i32
    %c0_i32_1 = arith.constant 0 : i32
    return %arg0, %c0_i32, %c0_i32_0 : i32, i32, i32
  }
}

</mosaic_0001>

<llo_original>
// kernel: _lambda_.1
$region0: #{_lambda_.1}
  #allocation0 [shape = 'u32[]', space=smem, size = 0x4, offset = 0x4, fixed_abs, tag = 'smem constant byte address 0x4 - core index']
  #allocation1 [shape = 'u32[144,128]{1,0:T(1,128)}', space=vmem, size = 0x12000, scoped, tag = 'internal scratch']
  #allocation2 [shape = 'f32[1,8,32]{2,1,0:T(8,128)}', space=vmem, size = 0x1000, scoped, tag = 'scratch operand']
  %s0 = inlined_call_operand.hbm [shape: f32[2,8,32], index: 0, kind: input, shape index: {}]
  %s1 = inlined_call_operand.hbm [shape: f32[2,8,8], index: 1, kind: input, shape index: {}]
  %s2 = inlined_call_operand.vmem [shape: f32[2,1,32], index: 2, kind: input, shape index: {}, may-alias: {2,8}]
  %s3 = inlined_call_operand.vmem [shape: f32[2,1,32], index: 3, kind: input, shape index: {}, may-alias: {3,9}]
  %s4 = inlined_call_operand.hbm [shape: bf16[2,32,96], index: 4, kind: input, shape index: {}]
  %s5 = inlined_call_operand.hbm [shape: f32[2,1,96], index: 5, kind: input, shape index: {}]
  %s6 = inlined_call_operand.hbm [shape: bf16[2,32,32], index: 6, kind: input, shape index: {}]
  %s7 = inlined_call_operand.hbm [shape: f32[2,1,32], index: 7, kind: input, shape index: {}]
  %s8 = inlined_call_operand.vmem [shape: f32[2,1,32], index: 8, kind: input, shape index: {}, may-alias: {2,8}]
  %s9 = inlined_call_operand.vmem [shape: f32[2,1,32], index: 9, kind: input, shape index: {}, may-alias: {3,9}]
  %s10 = inlined_call_operand.hbm [shape: bf16[2,32,64], index: 10, kind: input, shape index: {}]
  %s11 = inlined_call_operand.hbm [shape: f32[2,1,64], index: 11, kind: input, shape index: {}]
  %s12 = inlined_call_operand.vmem [shape: bf16[2,64,32], index: 12, kind: input, shape index: {}]
  %s13 = inlined_call_operand.hbm [shape: f32[2,1,32], index: 13, kind: input, shape index: {}]
  %s14 = inlined_call_operand.hbm [shape: f32[2,8,32], index: 14, kind: output, shape index: {}]
  %s15 = sld [smem:[#allocation0]]
  $region133: #{_lambda_.1} parent=0
    _
  %s17 = ssub.s32 1, %s15
  %s18 = scalar_select 0, %s17, %s15
  $region1: #{_lambda_.1} parent=0
    #allocation3 [shape = 'u8[8192]{0}', space=vmem, size = 0x2000, scoped, tag = 'input window, operand 0']
    #allocation4 [shape = 's32[2]{0}', space=sflag, size = 0x8, scoped, tag = 'scoped memory for _lambda_.1']
    #allocation5 [shape = 's32[2]{0}', space=sflag, size = 0x8, scoped, tag = 'scoped memory for _lambda_.1']
    #allocation6 [shape = 'u8[8192]{0}', space=vmem, size = 0x2000, scoped, tag = 'input window, operand 1']
    #allocation7 [shape = 's32[2]{0}', space=sflag, size = 0x8, scoped, tag = 'scoped memory for _lambda_.1']
    #allocation8 [shape = 'u8[16384]{0}', space=vmem, size = 0x4000, scoped, tag = 'input window, operand 4']
    #allocation9 [shape = 'u8[1024]{0}', space=vmem, size = 0x400, scoped, tag = 'input window, operand 5']
    #allocation10 [shape = 's32[2]{0}', space=sflag, size = 0x8, scoped, tag = 'scoped memory for _lambda_.1']
    #allocation11 [shape = 'u8[16384]{0}', space=vmem, size = 0x4000, scoped, tag = 'input window, operand 6']
    #allocation12 [shape = 'u8[1024]{0}', space=vmem, size = 0x400, scoped, tag = 'input window, operand 7']
    #allocation13 [shape = 's32[2]{0}', space=sflag, size = 0x8, scoped, tag = 'scoped memory for _lambda_.1']
    #allocation14 [shape = 'u8[16384]{0}', space=vmem, size = 0x4000, scoped, tag = 'input window, operand 10']
    #allocation15 [shape = 'u8[1024]{0}', space=vmem, size = 0x400, scoped, tag = 'input window, operand 11']
    #allocation16 [shape = 's32[2]{0}', space=sflag, size = 0x8, scoped, tag = 'scoped memory for _lambda_.1']
    #allocation17 [shape = 'u8[1024]{0}', space=vmem, size = 0x400, scoped, tag = 'input window, operand 13']
    #allocation18 [shape = 'u8[8192]{0}', space=vmem, size = 0x2000, scoped, tag = 'output window, operand 0']
    %19 = vsyncpa [#allocation4], 0
    %s20 = scalar_lea.sflag [#allocation4], 1
    %21 = vsyncpa %s20, 0
    %22 = vsyncpa [#allocation7], 0
    %s23 = scalar_lea.sflag [#allocation7], 1
    %24 = vsyncpa %s23, 0
    %25 = vsyncpa [#allocation10], 0
    %s26 = scalar_lea.sflag [#allocation10], 1
    %27 = vsyncpa %s26, 0
    %28 = vsyncpa [#allocation13], 0
    %s29 = scalar_lea.sflag [#allocation13], 1
    %30 = vsyncpa %s29, 0
    %31 = vsyncpa [#allocation16], 0
    %s32 = scalar_lea.sflag [#allocation16], 1
    %33 = vsyncpa %s32, 0
    %34 = vsyncpa [#allocation5], 0
    %s35 = scalar_lea.sflag [#allocation5], 1
    %36 = vsyncpa %s35, 0
    loop: start=0, step=1, limit=6
    $region2: #{_lambda_.1} parent=1 // loop_pre_header
      _
    $region3: #{_lambda_.1} parent=1 // loop_header
      %s38 = sphi 0, %s42
      %p39 = scmp.ge.s32.totalorder %s38, 6
      %s45 = sphi 0, %s57
      %s46 = sphi 0, %s53
      %s47 = sphi 0, %s45
      %s48 = sphi 0, %s46
      %s49 = sphi 0, %s47
      %s50 = sphi 0, %s48
      %s60 = sphi 0, %s62
      %s63 = sphi 0, %s60
      %s64 = sphi 0, %s63
      %s80 = sphi 0, %s64
      %s86 = sphi 0, %s88
      %s89 = sphi 0, %s86
      %s90 = sphi 0, %s89
      %s106 = sphi 0, %s90
      %s112 = sphi 0, %s114
      %s115 = sphi 0, %s112
      %s116 = sphi 0, %s115
      %s132 = sphi 0, %s116
      %s138 = sphi 0, %s140
      %s141 = sphi 0, %s138
      %s142 = sphi 0, %s141
      %s158 = sphi 0, %s142
      %s164 = sphi 0, %s166
      %s167 = sphi 0, %s164
      %s168 = sphi 0, %s167
      %s184 = sphi 0, %s168
      %s190 = sphi 0, %s192
      %s193 = sphi 0, %s190
      %s194 = sphi 0, %s193
      %s210 = sphi 0, %s194
      %s216 = sphi 0, %s218
      %s219 = sphi 0, %s216
      %s220 = sphi 0, %s219
      %s236 = sphi 0, %s220
      %s242 = sphi 0, %s244
      %s245 = sphi 0, %s242
      %s246 = sphi 0, %s245
      %s262 = sphi 0, %s246
      %s268 = sphi 0, %s270
      %s271 = sphi 0, %s268
      %s272 = sphi 0, %s271
      %s288 = sphi 0, %s272
      %s294 = sphi 0, %s296
      %s297 = sphi 0, %s294
      %s298 = sphi 0, %s297
      %s314 = sphi 0, %s298
      %s320 = sphi 0, %s322
      %s323 = sphi 0, %s320
      %s324 = sphi 0, %s323
      %s340 = sphi 0, %s324
      %s346 = sphi 0, %s348
      %s349 = sphi 0, %s346
      %s350 = sphi 0, %s349
      %s366 = sphi 0, %s350
      %s372 = sphi 0, %s374
      %s375 = sphi 0, %s372
      %s376 = sphi 0, %s375
      %s392 = sphi 0, %s376
      %s398 = sphi 0, %s400
      %s401 = sphi 0, %s398
      %s402 = sphi 0, %s401
      %s418 = sphi 0, %s402
      %s424 = sphi 0, %s426
      %s427 = sphi 0, %s424
      %s428 = sphi 0, %s427
      %s444 = sphi 0, %s428
    $region4: #{_lambda_.1} parent=1 // loop_header_branch
      %41 = sbr.rel (%p39) target = $region8
    $region5: #{_lambda_.1} parent=1 // loop_body
      %s43 = ssub.s32 %s38, 1
      %s44 = ssub.s32 %s38, 2
      %s51 = sadd.s32 1, %s46
      %p52 = scmp.ge.s32.totalorder %s51, 2
      %s53 = scalar_select %p52, 0, %s51
      %s54 = sadd.s32 1, %s45
      %s55 = scalar_select %p52, %s54, %s45
      %p56 = scmp.ge.s32.totalorder %s55, 2
      %s57 = scalar_select %p56, 0, %s55
      %s58 = ssub.s32 %s45, %s57
      %p59 = scmp.eq.s32.totalorder %s58, 0
      %s61 = sadd.s32 %s60, 1
      %s62 = scalar_select %p59, %s60, %s61
      %p65 = pneg %p59
      %p66 = scmp.eq.s32.totalorder %s38, 3
      %p67 = por %p65, %p66
      %p68 = scmp.ne.s32.totalorder %s60, %s63
      %p69 = scmp.eq.s32.totalorder %s38, 0
      %p70 = por %p68, %p69
      %p71 = scmp.ne.s32.totalorder %s60, %s63
      %p72 = scmp.eq.s32.totalorder %s43, 3
      %p73 = por %p71, %p72
      %p74 = scmp.ne.s32.totalorder %s63, %s64
      %p75 = scmp.eq.s32.totalorder %s43, 0
      %p76 = por %p74, %p75
      %p77 = scmp.ne.s32.totalorder %s63, %s64
      %p78 = scmp.eq.s32.totalorder %s44, 3
      %p79 = por %p77, %p78
      %p81 = scmp.ne.s32.totalorder %s64, %s80
      %p82 = scmp.eq.s32.totalorder %s44, 0
      %p83 = por %p81, %p82
      %s84 = ssub.s32 %s45, %s57
      %p85 = scmp.eq.s32.totalorder %s84, 0
      %s87 = sadd.s32 %s86, 1
      %s88 = scalar_select %p85, %s86, %s87
      %p91 = pneg %p85
      %p92 = scmp.eq.s32.totalorder %s38, 3
      %p93 = por %p91, %p92
      %p94 = scmp.ne.s32.totalorder %s86, %s89
      %p95 = scmp.eq.s32.totalorder %s38, 0
      %p96 = por %p94, %p95
      %p97 = scmp.ne.s32.totalorder %s86, %s89
      %p98 = scmp.eq.s32.totalorder %s43, 3
      %p99 = por %p97, %p98
      %p100 = scmp.ne.s32.totalorder %s89, %s90
      %p101 = scmp.eq.s32.totalorder %s43, 0
      %p102 = por %p100, %p101
      %p103 = scmp.ne.s32.totalorder %s89, %s90
      %p104 = scmp.eq.s32.totalorder %s44, 3
      %p105 = por %p103, %p104
      %p107 = scmp.ne.s32.totalorder %s90, %s106
      %p108 = scmp.eq.s32.totalorder %s44, 0
      %p109 = por %p107, %p108
      %s110 = ssub.s32 %s46, %s53
      %p111 = scmp.eq.s32.totalorder %s110, 0
      %s113 = sadd.s32 %s112, 1
      %s114 = scalar_select %p111, %s112, %s113
      %p117 = pneg %p111
      %p118 = scmp.eq.s32.totalorder %s38, 3
      %p119 = por %p117, %p118
      %p120 = scmp.ne.s32.totalorder %s112, %s115
      %p121 = scmp.eq.s32.totalorder %s38, 0
      %p122 = por %p120, %p121
      %p123 = scmp.ne.s32.totalorder %s112, %s115
      %p124 = scmp.eq.s32.totalorder %s43, 3
      %p125 = por %p123, %p124
      %p126 = scmp.ne.s32.totalorder %s115, %s116
      %p127 = scmp.eq.s32.totalorder %s43, 0
      %p128 = por %p126, %p127
      %p129 = scmp.ne.s32.totalorder %s115, %s116
      %p130 = scmp.eq.s32.totalorder %s44, 3
      %p131 = por %p129, %p130
      %p133 = scmp.ne.s32.totalorder %s116, %s132
      %p134 = scmp.eq.s32.totalorder %s44, 0
      %p135 = por %p133, %p134
      %s136 = ssub.s32 %s46, %s53
      %p137 = scmp.eq.s32.totalorder %s136, 0
      %s139 = sadd.s32 %s138, 1
      %s140 = scalar_select %p137, %s138, %s139
      %p143 = pneg %p137
      %p144 = scmp.eq.s32.totalorder %s38, 3
      %p145 = por %p143, %p144
      %p146 = scmp.ne.s32.totalorder %s138, %s141
      %p147 = scmp.eq.s32.totalorder %s38, 0
      %p148 = por %p146, %p147
      %p149 = scmp.ne.s32.totalorder %s138, %s141
      %p150 = scmp.eq.s32.totalorder %s43, 3
      %p151 = por %p149, %p150
      %p152 = scmp.ne.s32.totalorder %s141, %s142
      %p153 = scmp.eq.s32.totalorder %s43, 0
      %p154 = por %p152, %p153
      %p155 = scmp.ne.s32.totalorder %s141, %s142
      %p156 = scmp.eq.s32.totalorder %s44, 3
      %p157 = por %p155, %p156
      %p159 = scmp.ne.s32.totalorder %s142, %s158
      %p160 = scmp.eq.s32.totalorder %s44, 0
      %p161 = por %p159, %p160
      %s162 = ssub.s32 %s46, %s53
      %p163 = scmp.eq.s32.totalorder %s162, 0
      %s165 = sadd.s32 %s164, 1
      %s166 = scalar_select %p163, %s164, %s165
      %p169 = pneg %p163
      %p170 = scmp.eq.s32.totalorder %s38, 3
      %p171 = por %p169, %p170
      %p172 = scmp.ne.s32.totalorder %s164, %s167
      %p173 = scmp.eq.s32.totalorder %s38, 0
      %p174 = por %p172, %p173
      %p175 = scmp.ne.s32.totalorder %s164, %s167
      %p176 = scmp.eq.s32.totalorder %s43, 3
      %p177 = por %p175, %p176
      %p178 = scmp.ne.s32.totalorder %s167, %s168
      %p179 = scmp.eq.s32.totalorder %s43, 0
      %p180 = por %p178, %p179
      %p181 = scmp.ne.s32.totalorder %s167, %s168
      %p182 = scmp.eq.s32.totalorder %s44, 3
      %p183 = por %p181, %p182
      %p185 = scmp.ne.s32.totalorder %s168, %s184
      %p186 = scmp.eq.s32.totalorder %s44, 0
      %p187 = por %p185, %p186
      %s188 = ssub.s32 %s46, %s53
      %p189 = scmp.eq.s32.totalorder %s188, 0
      %s191 = sadd.s32 %s190, 1
      %s192 = scalar_select %p189, %s190, %s191
      %p195 = pneg %p189
      %p196 = scmp.eq.s32.totalorder %s38, 3
      %p197 = por %p195, %p196
      %p198 = scmp.ne.s32.totalorder %s190, %s193
      %p199 = scmp.eq.s32.totalorder %s38, 0
      %p200 = por %p198, %p199
      %p201 = scmp.ne.s32.totalorder %s190, %s193
      %p202 = scmp.eq.s32.totalorder %s43, 3
      %p203 = por %p201, %p202
      %p204 = scmp.ne.s32.totalorder %s193, %s194
      %p205 = scmp.eq.s32.totalorder %s43, 0
      %p206 = por %p204, %p205
      %p207 = scmp.ne.s32.totalorder %s193, %s194
      %p208 = scmp.eq.s32.totalorder %s44, 3
      %p209 = por %p207, %p208
      %p211 = scmp.ne.s32.totalorder %s194, %s210
      %p212 = scmp.eq.s32.totalorder %s44, 0
      %p213 = por %p211, %p212
      %s214 = ssub.s32 %s46, %s53
      %p215 = scmp.eq.s32.totalorder %s214, 0
      %s217 = sadd.s32 %s216, 1
      %s218 = scalar_select %p215, %s216, %s217
      %p221 = pneg %p215
      %p222 = scmp.eq.s32.totalorder %s38, 3
      %p223 = por %p221, %p222
      %p224 = scmp.ne.s32.totalorder %s216, %s219
      %p225 = scmp.eq.s32.totalorder %s38, 0
      %p226 = por %p224, %p225
      %p227 = scmp.ne.s32.totalorder %s216, %s219
      %p228 = scmp.eq.s32.totalorder %s43, 3
      %p229 = por %p227, %p228
      %p230 = scmp.ne.s32.totalorder %s219, %s220
      %p231 = scmp.eq.s32.totalorder %s43, 0
      %p232 = por %p230, %p231
      %p233 = scmp.ne.s32.totalorder %s219, %s220
      %p234 = scmp.eq.s32.totalorder %s44, 3
      %p235 = por %p233, %p234
      %p237 = scmp.ne.s32.totalorder %s220, %s236
      %p238 = scmp.eq.s32.totalorder %s44, 0
      %p239 = por %p237, %p238
      %s240 = ssub.s32 %s46, %s53
      %p241 = scmp.eq.s32.totalorder %s240, 0
      %s243 = sadd.s32 %s242, 1
      %s244 = scalar_select %p241, %s242, %s243
      %p247 = pneg %p241
      %p248 = scmp.eq.s32.totalorder %s38, 3
      %p249 = por %p247, %p248
      %p250 = scmp.ne.s32.totalorder %s242, %s245
      %p251 = scmp.eq.s32.totalorder %s38, 0
      %p252 = por %p250, %p251
      %p253 = scmp.ne.s32.totalorder %s242, %s245
      %p254 = scmp.eq.s32.totalorder %s43, 3
      %p255 = por %p253, %p254
      %p256 = scmp.ne.s32.totalorder %s245, %s246
      %p257 = scmp.eq.s32.totalorder %s43, 0
      %p258 = por %p256, %p257
      %p259 = scmp.ne.s32.totalorder %s245, %s246
      %p260 = scmp.eq.s32.totalorder %s44, 3
      %p261 = por %p259, %p260
      %p263 = scmp.ne.s32.totalorder %s246, %s262
      %p264 = scmp.eq.s32.totalorder %s44, 0
      %p265 = por %p263, %p264
      %s266 = ssub.s32 %s46, %s53
      %p267 = scmp.eq.s32.totalorder %s266, 0
      %s269 = sadd.s32 %s268, 1
      %s270 = scalar_select %p267, %s268, %s269
      %p273 = pneg %p267
      %p274 = scmp.eq.s32.totalorder %s38, 3
      %p275 = por %p273, %p274
      %p276 = scmp.ne.s32.totalorder %s268, %s271
      %p277 = scmp.eq.s32.totalorder %s38, 0
      %p278 = por %p276, %p277
      %p279 = scmp.ne.s32.totalorder %s268, %s271
      %p280 = scmp.eq.s32.totalorder %s43, 3
      %p281 = por %p279, %p280
      %p282 = scmp.ne.s32.totalorder %s271, %s272
      %p283 = scmp.eq.s32.totalorder %s43, 0
      %p284 = por %p282, %p283
      %p285 = scmp.ne.s32.totalorder %s271, %s272
      %p286 = scmp.eq.s32.totalorder %s44, 3
      %p287 = por %p285, %p286
      %p289 = scmp.ne.s32.totalorder %s272, %s288
      %p290 = scmp.eq.s32.totalorder %s44, 0
      %p291 = por %p289, %p290
      %s292 = ssub.s32 %s46, %s53
      %p293 = scmp.eq.s32.totalorder %s292, 0
      %s295 = sadd.s32 %s294, 1
      %s296 = scalar_select %p293, %s294, %s295
      %p299 = pneg %p293
      %p300 = scmp.eq.s32.totalorder %s38, 3
      %p301 = por %p299, %p300
      %p302 = scmp.ne.s32.totalorder %s294, %s297
      %p303 = scmp.eq.s32.totalorder %s38, 0
      %p304 = por %p302, %p303
      %p305 = scmp.ne.s32.totalorder %s294, %s297
      %p306 = scmp.eq.s32.totalorder %s43, 3
      %p307 = por %p305, %p306
      %p308 = scmp.ne.s32.totalorder %s297, %s298
      %p309 = scmp.eq.s32.totalorder %s43, 0
      %p310 = por %p308, %p309
      %p311 = scmp.ne.s32.totalorder %s297, %s298
      %p312 = scmp.eq.s32.totalorder %s44, 3
      %p313 = por %p311, %p312
      %p315 = scmp.ne.s32.totalorder %s298, %s314
      %p316 = scmp.eq.s32.totalorder %s44, 0
      %p317 = por %p315, %p316
      %s318 = ssub.s32 %s46, %s53
      %p319 = scmp.eq.s32.totalorder %s318, 0
      %s321 = sadd.s32 %s320, 1
      %s322 = scalar_select %p319, %s320, %s321
      %p325 = pneg %p319
      %p326 = scmp.eq.s32.totalorder %s38, 3
      %p327 = por %p325, %p326
      %p328 = scmp.ne.s32.totalorder %s320, %s323
      %p329 = scmp.eq.s32.totalorder %s38, 0
      %p330 = por %p328, %p329
      %p331 = scmp.ne.s32.totalorder %s320, %s323
      %p332 = scmp.eq.s32.totalorder %s43, 3
      %p333 = por %p331, %p332
      %p334 = scmp.ne.s32.totalorder %s323, %s324
      %p335 = scmp.eq.s32.totalorder %s43, 0
      %p336 = por %p334, %p335
      %p337 = scmp.ne.s32.totalorder %s323, %s324
      %p338 = scmp.eq.s32.totalorder %s44, 3
      %p339 = por %p337, %p338
      %p341 = scmp.ne.s32.totalorder %s324, %s340
      %p342 = scmp.eq.s32.totalorder %s44, 0
      %p343 = por %p341, %p342
      %s344 = ssub.s32 %s46, %s53
      %p345 = scmp.eq.s32.totalorder %s344, 0
      %s347 = sadd.s32 %s346, 1
      %s348 = scalar_select %p345, %s346, %s347
      %p351 = pneg %p345
      %p352 = scmp.eq.s32.totalorder %s38, 3
      %p353 = por %p351, %p352
      %p354 = scmp.ne.s32.totalorder %s346, %s349
      %p355 = scmp.eq.s32.totalorder %s38, 0
      %p356 = por %p354, %p355
      %p357 = scmp.ne.s32.totalorder %s346, %s349
      %p358 = scmp.eq.s32.totalorder %s43, 3
      %p359 = por %p357, %p358
      %p360 = scmp.ne.s32.totalorder %s349, %s350
      %p361 = scmp.eq.s32.totalorder %s43, 0
      %p362 = por %p360, %p361
      %p363 = scmp.ne.s32.totalorder %s349, %s350
      %p364 = scmp.eq.s32.totalorder %s44, 3
      %p365 = por %p363, %p364
      %p367 = scmp.ne.s32.totalorder %s350, %s366
      %p368 = scmp.eq.s32.totalorder %s44, 0
      %p369 = por %p367, %p368
      %s370 = ssub.s32 %s46, %s53
      %p371 = scmp.eq.s32.totalorder %s370, 0
      %s373 = sadd.s32 %s372, 1
      %s374 = scalar_select %p371, %s372, %s373
      %p377 = pneg %p371
      %p378 = scmp.eq.s32.totalorder %s38, 3
      %p379 = por %p377, %p378
      %p380 = scmp.ne.s32.totalorder %s372, %s375
      %p381 = scmp.eq.s32.totalorder %s38, 0
      %p382 = por %p380, %p381
      %p383 = scmp.ne.s32.totalorder %s372, %s375
      %p384 = scmp.eq.s32.totalorder %s43, 3
      %p385 = por %p383, %p384
      %p386 = scmp.ne.s32.totalorder %s375, %s376
      %p387 = scmp.eq.s32.totalorder %s43, 0
      %p388 = por %p386, %p387
      %p389 = scmp.ne.s32.totalorder %s375, %s376
      %p390 = scmp.eq.s32.totalorder %s44, 3
      %p391 = por %p389, %p390
      %p393 = scmp.ne.s32.totalorder %s376, %s392
      %p394 = scmp.eq.s32.totalorder %s44, 0
      %p395 = por %p393, %p394
      %s396 = ssub.s32 %s46, %s53
      %p397 = scmp.eq.s32.totalorder %s396, 0
      %s399 = sadd.s32 %s398, 1
      %s400 = scalar_select %p397, %s398, %s399
      %p403 = pneg %p397
      %p404 = scmp.eq.s32.totalorder %s38, 3
      %p405 = por %p403, %p404
      %p406 = scmp.ne.s32.totalorder %s398, %s401
      %p407 = scmp.eq.s32.totalorder %s38, 0
      %p408 = por %p406, %p407
      %p409 = scmp.ne.s32.totalorder %s398, %s401
      %p410 = scmp.eq.s32.totalorder %s43, 3
      %p411 = por %p409, %p410
      %p412 = scmp.ne.s32.totalorder %s401, %s402
      %p413 = scmp.eq.s32.totalorder %s43, 0
      %p414 = por %p412, %p413
      %p415 = scmp.ne.s32.totalorder %s401, %s402
      %p416 = scmp.eq.s32.totalorder %s44, 3
      %p417 = por %p415, %p416
      %p419 = scmp.ne.s32.totalorder %s402, %s418
      %p420 = scmp.eq.s32.totalorder %s44, 0
      %p421 = por %p419, %p420
      %s422 = ssub.s32 %s45, %s57
      %p423 = scmp.eq.s32.totalorder %s422, 0
      %s425 = sadd.s32 %s424, 1
      %s426 = scalar_select %p423, %s424, %s425
      %p429 = pneg %p423
      %p430 = scmp.eq.s32.totalorder %s38, 3
      %p431 = por %p429, %p430
      %p432 = scmp.ne.s32.totalorder %s424, %s427
      %p433 = scmp.eq.s32.totalorder %s38, 0
      %p434 = por %p432, %p433
      %p435 = scmp.ne.s32.totalorder %s424, %s427
      %p436 = scmp.eq.s32.totalorder %s43, 3
      %p437 = por %p435, %p436
      %p438 = scmp.ne.s32.totalorder %s427, %s428
      %p439 = scmp.eq.s32.totalorder %s43, 0
      %p440 = por %p438, %p439
      %p441 = scmp.ne.s32.totalorder %s427, %s428
      %p442 = scmp.eq.s32.totalorder %s44, 3
      %p443 = por %p441, %p442
      %p445 = scmp.ne.s32.totalorder %s428, %s444
      %p446 = scmp.eq.s32.totalorder %s44, 0
      %p447 = por %p445, %p446
      %p448 = scmp.le.s32.totalorder 1, %s38
      %p449 = scmp.lt.s32.totalorder %s38, 5
      %p450 = pnand %p448, %p449
      %p451 = pneg %p450
      // Predicated region
      $region9: #{_lambda_.1} parent=5 // pred_check
        _
      $region10: #{_lambda_.1} parent=5 // pred_check_branch
        %453 = sbr.rel (%p450) target = $region12
      $region11: #{_lambda_.1} parent=5 // pred_region
        %s454 = ssub.s32 %s38, 1
      $region12: #{_lambda_.1} parent=5 // pred_fallthru
        _
      %p455 = scmp.lt.s32.totalorder %s38, 4
      // Predicated region
      $region13: #{_lambda_.1} parent=5 // pred_check
        %p456 = pneg %p455
      $region14: #{_lambda_.1} parent=5 // pred_check_branch
        %458 = sbr.rel (%p456) target = $region16
      $region15: #{_lambda_.1} parent=5 // pred_region
        // Predicated region
        $region17: #{_lambda_.1} parent=15 // pred_check
          %p459 = pneg %p70
        $region18: #{_lambda_.1} parent=15 // pred_check_branch
          %461 = sbr.rel (%p459) target = $region20
        $region19: #{_lambda_.1} parent=15 // pred_region
          %s462 = sand.u32 %s60, 1
          %s463 = scalar_lea.sflag [#allocation4], %s462
          %s464 = sand.u32 %s60, 1
          %s465 = smul.addr %s464, 8
          %s466 = scalar_lea.vmem [#allocation3], %s465
          %s468 = ssub.s32 128, 128
          %469 = vsyncadd %s463, %s468
          %s470 = smul.addr %s45, 128
          %s471 = scalar_lea.hbm %s0, %s470
          %s473 = sshll.u32 %s466, 4
          %s474 = int_to_ptr.vmem [resolvable:$true] %s473
          %476 = dma.hbm_to_vmem [thread:$0]  %s471, 128, %s474, %s463
        $region20: #{_lambda_.1} parent=15 // pred_fallthru
          _
        // Predicated region
        $region21: #{_lambda_.1} parent=15 // pred_check
          %p477 = pneg %p96
        $region22: #{_lambda_.1} parent=15 // pred_check_branch
          %479 = sbr.rel (%p477) target = $region24
        $region23: #{_lambda_.1} parent=15 // pred_region
          %s480 = sand.u32 %s38, 1
          %s481 = scalar_lea.sflag [#allocation7], %s480
          %s482 = sand.u32 %s86, 1
          %s483 = smul.addr %s482, 8
          %s484 = scalar_lea.vmem [#allocation6], %s483
          %s486 = ssub.s32 128, 128
          %487 = vsyncadd %s481, %s486
          %s488 = smul.addr %s45, 128
          %s489 = scalar_lea.hbm %s1, %s488
          %s491 = sshll.u32 %s484, 4
          %s492 = int_to_ptr.vmem [resolvable:$true] %s491
          %494 = dma.hbm_to_vmem [thread:$0]  %s489, 128, %s492, %s481
        $region24: #{_lambda_.1} parent=15 // pred_fallthru
          _
        // Predicated region
        $region25: #{_lambda_.1} parent=15 // pred_check
          %p495 = pneg %p122
        $region26: #{_lambda_.1} parent=15 // pred_check_branch
          %497 = sbr.rel (%p495) target = $region28
        $region27: #{_lambda_.1} parent=15 // pred_region
          %p498 = scmp.lt.s32.totalorder %s46, 1
          %s499 = scalar_select %p498, %s46, 1
          %s500 = scalar_lea.vmem %s2, %s499
        $region28: #{_lambda_.1} parent=15 // pred_fallthru
          _
        // Predicated region
        $region29: #{_lambda_.1} parent=15 // pred_check
          %p501 = pneg %p148
        $region30: #{_lambda_.1} parent=15 // pred_check_branch
          %503 = sbr.rel (%p501) target = $region32
        $region31: #{_lambda_.1} parent=15 // pred_region
          %p504 = scmp.lt.s32.totalorder %s46, 1
          %s505 = scalar_select %p504, %s46, 1
          %s506 = scalar_lea.vmem %s3, %s505
        $region32: #{_lambda_.1} parent=15 // pred_fallthru
          _
        // Predicated region
        $region33: #{_lambda_.1} parent=15 // pred_check
          %p507 = pneg %p174
        $region34: #{_lambda_.1} parent=15 // pred_check_branch
          %509 = sbr.rel (%p507) target = $region36
        $region35: #{_lambda_.1} parent=15 // pred_region
          %s510 = sand.u32 %s38, 1
          %s511 = scalar_lea.sflag [#allocation7], %s510
          %s512 = sand.u32 %s164, 1
          %s513 = smul.addr %s512, 16
          %s514 = scalar_lea.vmem [#allocation8], %s513
          %s516 = ssub.s32 256, 256
          %517 = vsyncadd %s511, %s516
          %s518 = smul.addr %s46, 4
          %s519 = smul.addr %s518, 64
          %s520 = scalar_lea.hbm %s4, %s519
          %s521 = sshll.u32 %s514, 4
          %s522 = int_to_ptr.vmem [resolvable:$true] %s521
          %527 = dma.hbm_to_vmem [thread:$0]  %s520, 256, %s522, %s511, 64, 64, 4
        $region36: #{_lambda_.1} parent=15 // pred_fallthru
          _
        // Predicated region
        $region37: #{_lambda_.1} parent=15 // pred_check
          %p528 = pneg %p200
        $region38: #{_lambda_.1} parent=15 // pred_check_branch
          %530 = sbr.rel (%p528) target = $region40
        $region39: #{_lambda_.1} parent=15 // pred_region
          %s531 = sand.u32 %s38, 1
          %s532 = scalar_lea.sflag [#allocation10], %s531
          %s533 = sand.u32 %s190, 1
          %s534 = scalar_lea.vmem [#allocation9], %s533
          %s536 = ssub.s32 16, 16
          %537 = vsyncadd %s532, %s536
          %s538 = smul.addr %s46, 16
          %s539 = scalar_lea.hbm %s5, %s538
          %s541 = sshll.u32 %s534, 4
          %s542 = int_to_ptr.vmem [resolvable:$true] %s541
          %544 = dma.hbm_to_vmem [thread:$0]  %s539, 16, %s542, %s532
        $region40: #{_lambda_.1} parent=15 // pred_fallthru
          _
        // Predicated region
        $region41: #{_lambda_.1} parent=15 // pred_check
          %p545 = pneg %p226
        $region42: #{_lambda_.1} parent=15 // pred_check_branch
          %547 = sbr.rel (%p545) target = $region44
        $region43: #{_lambda_.1} parent=15 // pred_region
          %s548 = sand.u32 %s38, 1
          %s549 = scalar_lea.sflag [#allocation10], %s548
          %s550 = sand.u32 %s216, 1
          %s551 = smul.addr %s550, 16
          %s552 = scalar_lea.vmem [#allocation11], %s551
          %s554 = ssub.s32 256, 256
          %555 = vsyncadd %s549, %s554
          %s556 = smul.addr %s46, 4
          %s557 = smul.addr %s556, 64
          %s558 = scalar_lea.hbm %s6, %s557
          %s559 = sshll.u32 %s552, 4
          %s560 = int_to_ptr.vmem [resolvable:$true] %s559
          %565 = dma.hbm_to_vmem [thread:$0]  %s558, 256, %s560, %s549, 64, 64, 4
        $region44: #{_lambda_.1} parent=15 // pred_fallthru
          _
        // Predicated region
        $region45: #{_lambda_.1} parent=15 // pred_check
          %p566 = pneg %p252
        $region46: #{_lambda_.1} parent=15 // pred_check_branch
          %568 = sbr.rel (%p566) target = $region48
        $region47: #{_lambda_.1} parent=15 // pred_region
          %s569 = sand.u32 %s38, 1
          %s570 = scalar_lea.sflag [#allocation13], %s569
          %s571 = sand.u32 %s242, 1
          %s572 = scalar_lea.vmem [#allocation12], %s571
          %s574 = ssub.s32 16, 16
          %575 = vsyncadd %s570, %s574
          %s576 = smul.addr %s46, 16
          %s577 = scalar_lea.hbm %s7, %s576
          %s579 = sshll.u32 %s572, 4
          %s580 = int_to_ptr.vmem [resolvable:$true] %s579
          %582 = dma.hbm_to_vmem [thread:$0]  %s577, 16, %s580, %s570
        $region48: #{_lambda_.1} parent=15 // pred_fallthru
          _
        // Predicated region
        $region49: #{_lambda_.1} parent=15 // pred_check
          %p583 = pneg %p278
        $region50: #{_lambda_.1} parent=15 // pred_check_branch
          %585 = sbr.rel (%p583) target = $region52
        $region51: #{_lambda_.1} parent=15 // pred_region
          %p586 = scmp.lt.s32.totalorder %s46, 1
          %s587 = scalar_select %p586, %s46, 1
          %s588 = scalar_lea.vmem %s8, %s587
        $region52: #{_lambda_.1} parent=15 // pred_fallthru
          _
        // Predicated region
        $region53: #{_lambda_.1} parent=15 // pred_check
          %p589 = pneg %p304
        $region54: #{_lambda_.1} parent=15 // pred_check_branch
          %591 = sbr.rel (%p589) target = $region56
        $region55: #{_lambda_.1} parent=15 // pred_region
          %p592 = scmp.lt.s32.totalorder %s46, 1
          %s593 = scalar_select %p592, %s46, 1
          %s594 = scalar_lea.vmem %s9, %s593
        $region56: #{_lambda_.1} parent=15 // pred_fallthru
          _
        // Predicated region
        $region57: #{_lambda_.1} parent=15 // pred_check
          %p595 = pneg %p330
        $region58: #{_lambda_.1} parent=15 // pred_check_branch
          %597 = sbr.rel (%p595) target = $region60
        $region59: #{_lambda_.1} parent=15 // pred_region
          %s598 = sand.u32 %s38, 1
          %s599 = scalar_lea.sflag [#allocation13], %s598
          %s600 = sand.u32 %s320, 1
          %s601 = smul.addr %s600, 16
          %s602 = scalar_lea.vmem [#allocation14], %s601
          %s604 = ssub.s32 256, 256
          %605 = vsyncadd %s599, %s604
          %s606 = smul.addr %s46, 4
          %s607 = smul.addr %s606, 64
          %s608 = scalar_lea.hbm %s10, %s607
          %s609 = sshll.u32 %s602, 4
          %s610 = int_to_ptr.vmem [resolvable:$true] %s609
          %615 = dma.hbm_to_vmem [thread:$0]  %s608, 256, %s610, %s599, 64, 64, 4
        $region60: #{_lambda_.1} parent=15 // pred_fallthru
          _
        // Predicated region
        $region61: #{_lambda_.1} parent=15 // pred_check
          %p616 = pneg %p356
        $region62: #{_lambda_.1} parent=15 // pred_check_branch
          %618 = sbr.rel (%p616) target = $region64
        $region63: #{_lambda_.1} parent=15 // pred_region
          %s619 = sand.u32 %s38, 1
          %s620 = scalar_lea.sflag [#allocation16], %s619
          %s621 = sand.u32 %s346, 1
          %s622 = scalar_lea.vmem [#allocation15], %s621
          %s624 = ssub.s32 16, 16
          %625 = vsyncadd %s620, %s624
          %s626 = smul.addr %s46, 16
          %s627 = scalar_lea.hbm %s11, %s626
          %s629 = sshll.u32 %s622, 4
          %s630 = int_to_ptr.vmem [resolvable:$true] %s629
          %632 = dma.hbm_to_vmem [thread:$0]  %s627, 16, %s630, %s620
        $region64: #{_lambda_.1} parent=15 // pred_fallthru
          _
        // Predicated region
        $region65: #{_lambda_.1} parent=15 // pred_check
          %p633 = pneg %p382
        $region66: #{_lambda_.1} parent=15 // pred_check_branch
          %635 = sbr.rel (%p633) target = $region68
        $region67: #{_lambda_.1} parent=15 // pred_region
          %p636 = scmp.lt.s32.totalorder %s46, 1
          %s637 = scalar_select %p636, %s46, 1
          %s638 = smul.addr %s637, 8
          %s639 = smul.addr %s638, 4
          %s640 = scalar_lea.vmem %s12, %s639
        $region68: #{_lambda_.1} parent=15 // pred_fallthru
          _
        // Predicated region
        $region69: #{_lambda_.1} parent=15 // pred_check
          %p641 = pneg %p408
        $region70: #{_lambda_.1} parent=15 // pred_check_branch
          %643 = sbr.rel (%p641) target = $region72
        $region71: #{_lambda_.1} parent=15 // pred_region
          %s644 = sand.u32 %s38, 1
          %s645 = scalar_lea.sflag [#allocation16], %s644
          %s646 = sand.u32 %s398, 1
          %s647 = scalar_lea.vmem [#allocation17], %s646
          %s649 = ssub.s32 16, 16
          %650 = vsyncadd %s645, %s649
          %s651 = smul.addr %s46, 16
          %s652 = scalar_lea.hbm %s13, %s651
          %s654 = sshll.u32 %s647, 4
          %s655 = int_to_ptr.vmem [resolvable:$true] %s654
          %657 = dma.hbm_to_vmem [thread:$0]  %s652, 16, %s655, %s645
        $region72: #{_lambda_.1} parent=15 // pred_fallthru
          _
      $region16: #{_lambda_.1} parent=5 // pred_fallthru
        _
      %p658 = scmp.le.s32.totalorder 1, %s38
      %p659 = scmp.lt.s32.totalorder %s38, 5
      %p660 = pnand %p658, %p659
      %p661 = pneg %p660
      // Predicated region
      $region73: #{_lambda_.1} parent=5 // pred_check
        _
      $region74: #{_lambda_.1} parent=5 // pred_check_branch
        %663 = sbr.rel (%p660) target = $region76
      $region75: #{_lambda_.1} parent=5 // pred_region
        %s664 = ssub.s32 %s38, 1
        %s665 = sand.u32 %s63, 1
        %s666 = scalar_lea.sflag [#allocation4], %s665
        %s667 = sand.u32 %s63, 1
        %s668 = smul.addr %s667, 8
        %s669 = scalar_lea.vmem [#allocation3], %s668
        // Predicated region
        $region77: #{_lambda_.1} parent=75 // pred_check
          %p670 = pneg %p76
        $region78: #{_lambda_.1} parent=75 // pred_check_branch
          %672 = sbr.rel (%p670) target = $region80
        $region79: #{_lambda_.1} parent=75 // pred_region
          %673 = dma.done %s666, 128
        $region80: #{_lambda_.1} parent=75 // pred_fallthru
          _
        %s674 = sand.u32 %s43, 1
        %s675 = scalar_lea.sflag [#allocation7], %s674
        %s676 = sand.u32 %s89, 1
        %s677 = smul.addr %s676, 8
        %s678 = scalar_lea.vmem [#allocation6], %s677
        // Predicated region
        $region81: #{_lambda_.1} parent=75 // pred_check
          %p679 = pneg %p102
        $region82: #{_lambda_.1} parent=75 // pred_check_branch
          %681 = sbr.rel (%p679) target = $region84
        $region83: #{_lambda_.1} parent=75 // pred_region
          %682 = dma.done %s675, 128
        $region84: #{_lambda_.1} parent=75 // pred_fallthru
          _
        %s683 = sand.u32 %s43, 1
        %s684 = scalar_lea.sflag [#allocation7], %s683
        %s685 = sand.u32 %s167, 1
        %s686 = smul.addr %s685, 16
        %s687 = scalar_lea.vmem [#allocation8], %s686
        // Predicated region
        $region85: #{_lambda_.1} parent=75 // pred_check
          %p688 = pneg %p180
        $region86: #{_lambda_.1} parent=75 // pred_check_branch
          %690 = sbr.rel (%p688) target = $region88
        $region87: #{_lambda_.1} parent=75 // pred_region
          %691 = dma.done %s684, 256
        $region88: #{_lambda_.1} parent=75 // pred_fallthru
          _
        %s692 = sand.u32 %s43, 1
        %s693 = scalar_lea.sflag [#allocation10], %s692
        %s694 = sand.u32 %s193, 1
        %s695 = scalar_lea.vmem [#allocation9], %s694
        // Predicated region
        $region89: #{_lambda_.1} parent=75 // pred_check
          %p696 = pneg %p206
        $region90: #{_lambda_.1} parent=75 // pred_check_branch
          %698 = sbr.rel (%p696) target = $region92
        $region91: #{_lambda_.1} parent=75 // pred_region
          %699 = dma.done %s693, 16
        $region92: #{_lambda_.1} parent=75 // pred_fallthru
          _
        %s700 = sand.u32 %s43, 1
        %s701 = scalar_lea.sflag [#allocation10], %s700
        %s702 = sand.u32 %s219, 1
        %s703 = smul.addr %s702, 16
        %s704 = scalar_lea.vmem [#allocation11], %s703
        // Predicated region
        $region93: #{_lambda_.1} parent=75 // pred_check
          %p705 = pneg %p232
        $region94: #{_lambda_.1} parent=75 // pred_check_branch
          %707 = sbr.rel (%p705) target = $region96
        $region95: #{_lambda_.1} parent=75 // pred_region
          %708 = dma.done %s701, 256
        $region96: #{_lambda_.1} parent=75 // pred_fallthru
          _
        %s709 = sand.u32 %s43, 1
        %s710 = scalar_lea.sflag [#allocation13], %s709
        %s711 = sand.u32 %s245, 1
        %s712 = scalar_lea.vmem [#allocation12], %s711
        // Predicated region
        $region97: #{_lambda_.1} parent=75 // pred_check
          %p713 = pneg %p258
        $region98: #{_lambda_.1} parent=75 // pred_check_branch
          %715 = sbr.rel (%p713) target = $region100
        $region99: #{_lambda_.1} parent=75 // pred_region
          %716 = dma.done %s710, 16
        $region100: #{_lambda_.1} parent=75 // pred_fallthru
          _
        %s717 = sand.u32 %s43, 1
        %s718 = scalar_lea.sflag [#allocation13], %s717
        %s719 = sand.u32 %s323, 1
        %s720 = smul.addr %s719, 16
        %s721 = scalar_lea.vmem [#allocation14], %s720
        // Predicated region
        $region101: #{_lambda_.1} parent=75 // pred_check
          %p722 = pneg %p336
        $region102: #{_lambda_.1} parent=75 // pred_check_branch
          %724 = sbr.rel (%p722) target = $region104
        $region103: #{_lambda_.1} parent=75 // pred_region
          %725 = dma.done %s718, 256
        $region104: #{_lambda_.1} parent=75 // pred_fallthru
          _
        %s726 = sand.u32 %s43, 1
        %s727 = scalar_lea.sflag [#allocation16], %s726
        %s728 = sand.u32 %s349, 1
        %s729 = scalar_lea.vmem [#allocation15], %s728
        // Predicated region
        $region105: #{_lambda_.1} parent=75 // pred_check
          %p730 = pneg %p362
        $region106: #{_lambda_.1} parent=75 // pred_check_branch
          %732 = sbr.rel (%p730) target = $region108
        $region107: #{_lambda_.1} parent=75 // pred_region
          %733 = dma.done %s727, 16
        $region108: #{_lambda_.1} parent=75 // pred_fallthru
          _
        %s734 = sand.u32 %s43, 1
        %s735 = scalar_lea.sflag [#allocation16], %s734
        %s736 = sand.u32 %s401, 1
        %s737 = scalar_lea.vmem [#allocation17], %s736
        // Predicated region
        $region109: #{_lambda_.1} parent=75 // pred_check
          %p738 = pneg %p414
        $region110: #{_lambda_.1} parent=75 // pred_check_branch
          %740 = sbr.rel (%p738) target = $region112
        $region111: #{_lambda_.1} parent=75 // pred_region
          %741 = dma.done %s735, 16
        $region112: #{_lambda_.1} parent=75 // pred_fallthru
          _
        %s742 = sand.u32 %s63, 1
        %s743 = scalar_lea.sflag [#allocation4], %s742
        %s744 = sand.u32 %s63, 1
        %s745 = smul.addr %s744, 8
        %s746 = scalar_lea.vmem [#allocation3], %s745
        %p747 = pneg %p76
        %p748 = pneg %p73
        %s749 = sand.u32 %s43, 1
        %s750 = scalar_lea.sflag [#allocation7], %s749
        %s751 = sand.u32 %s89, 1
        %s752 = smul.addr %s751, 8
        %s753 = scalar_lea.vmem [#allocation6], %s752
        %p754 = pneg %p102
        %p755 = pneg %p99
        %p756 = scmp.lt.s32.totalorder %s48, 1
        %s757 = scalar_select %p756, %s48, 1
        %s758 = scalar_lea.vmem %s2, %s757
        %p759 = pneg %p128
        %p760 = pneg %p125
        %p761 = scmp.lt.s32.totalorder %s48, 1
        %s762 = scalar_select %p761, %s48, 1
        %s763 = scalar_lea.vmem %s3, %s762
        %p764 = pneg %p154
        %p765 = pneg %p151
        %s766 = sand.u32 %s43, 1
        %s767 = scalar_lea.sflag [#allocation7], %s766
        %s768 = sand.u32 %s167, 1
        %s769 = smul.addr %s768, 16
        %s770 = scalar_lea.vmem [#allocation8], %s769
        %p771 = pneg %p180
        %p772 = pneg %p177
        %s773 = sand.u32 %s43, 1
        %s774 = scalar_lea.sflag [#allocation10], %s773
        %s775 = sand.u32 %s193, 1
        %s776 = scalar_lea.vmem [#allocation9], %s775
        %p777 = pneg %p206
        %p778 = pneg %p203
        %s779 = sand.u32 %s43, 1
        %s780 = scalar_lea.sflag [#allocation10], %s779
        %s781 = sand.u32 %s219, 1
        %s782 = smul.addr %s781, 16
        %s783 = scalar_lea.vmem [#allocation11], %s782
        %p784 = pneg %p232
        %p785 = pneg %p229
        %s786 = sand.u32 %s43, 1
        %s787 = scalar_lea.sflag [#allocation13], %s786
        %s788 = sand.u32 %s245, 1
        %s789 = scalar_lea.vmem [#allocation12], %s788
        %p790 = pneg %p258
        %p791 = pneg %p255
        %p792 = scmp.lt.s32.totalorder %s48, 1
        %s793 = scalar_select %p792, %s48, 1
        %s794 = scalar_lea.vmem %s8, %s793
        %p795 = pneg %p284
        %p796 = pneg %p281
        %p797 = scmp.lt.s32.totalorder %s48, 1
        %s798 = scalar_select %p797, %s48, 1
        %s799 = scalar_lea.vmem %s9, %s798
        %p800 = pneg %p310
        %p801 = pneg %p307
        %s802 = sand.u32 %s43, 1
        %s803 = scalar_lea.sflag [#allocation13], %s802
        %s804 = sand.u32 %s323, 1
        %s805 = smul.addr %s804, 16
        %s806 = scalar_lea.vmem [#allocation14], %s805
        %p807 = pneg %p336
        %p808 = pneg %p333
        %s809 = sand.u32 %s43, 1
        %s810 = scalar_lea.sflag [#allocation16], %s809
        %s811 = sand.u32 %s349, 1
        %s812 = scalar_lea.vmem [#allocation15], %s811
        %p813 = pneg %p362
        %p814 = pneg %p359
        %p815 = scmp.lt.s32.totalorder %s48, 1
        %s816 = scalar_select %p815, %s48, 1
        %s817 = smul.addr %s816, 8
        %s818 = smul.addr %s817, 4
        %s819 = scalar_lea.vmem %s12, %s818
        %p820 = pneg %p388
        %p821 = pneg %p385
        %s822 = sand.u32 %s43, 1
        %s823 = scalar_lea.sflag [#allocation16], %s822
        %s824 = sand.u32 %s401, 1
        %s825 = scalar_lea.vmem [#allocation17], %s824
        %p826 = pneg %p414
        %p827 = pneg %p411
        %p828 = pneg %p440
        %p829 = pneg %p437
        %s830 = sand.u32 %s427, 1
        %s831 = scalar_lea.sflag [#allocation5], %s830
        %s832 = sand.u32 %s427, 1
        %s833 = smul.addr %s832, 8
        %s834 = scalar_lea.vmem [#allocation18], %s833
        %p835 = scmp.lt.s32.totalorder %s48, 1
        %s836 = scalar_select %p835, %s48, 1
        %s837 = scalar_lea.vmem %s2, %s836
        %p838 = scmp.lt.s32.totalorder %s48, 1
        %s839 = scalar_select %p838, %s48, 1
        %s840 = scalar_lea.vmem %s3, %s839
        %p841 = scmp.lt.s32.totalorder %s48, 1
        %s842 = scalar_select %p841, %s48, 1
        %s843 = scalar_lea.vmem %s8, %s842
        %p844 = scmp.lt.s32.totalorder %s48, 1
        %s845 = scalar_select %p844, %s48, 1
        %s846 = scalar_lea.vmem %s9, %s845
        %p847 = scmp.lt.s32.totalorder %s48, 1
        %s848 = scalar_select %p847, %s48, 1
        %s849 = smul.addr %s848, 8
        %s850 = smul.addr %s849, 4
        %s851 = scalar_lea.vmem %s12, %s850
        %p853 = scmp.eq.s32.totalorder %s48, 0
        // Predicated region
        $region113: #{_lambda_.1} parent=75 // pred_check
          %p854 = pneg %p853
        $region114: #{_lambda_.1} parent=75 // pred_check_branch
          %856 = sbr.rel (%p854) target = $region116
        $region115: #{_lambda_.1} parent=75 // pred_region
          %v857 = vld [vmem:[%s669] sm:$0xff]
          %vm858 = vcmask 261120
          %859 = vst.msk [vmem:[#allocation2] sm:$0xff] %vm858, %v857
        $region116: #{_lambda_.1} parent=75 // pred_fallthru
          _
        %v860 = vld [vmem:[#allocation2] sm:$0xff]
        %v861 = vld [vmem:[%s678] sm:$0xff]
        %v862 = vld [vmem:[%s837] sm:$0x1]
        %v863 = vld [vmem:[%s840] sm:$0x1]
        %vm864 = vcmask 261120
        %v865 = vsel %vm864, %v860, 0.0
        %866 = vadd.xlane.f32.xlu0 %v865
        %v867 = vpop.xlane.xlu0 %866
        %v868 = vrcp.pop 32.0
        %v869 = vmul.f32 %v867, %v868
        %v870 = vsub.f32 %v860, %v869
        %v871 = vmul.f32 %v870, %v870
        %v872 = vsel %vm864, %v871, 0.0
        %873 = vadd.xlane.f32.xlu0 %v872
        %v874 = vpop.xlane.xlu0 %873
        %v875 = vmul.f32 %v874, %v868
        %v876 = vadd.f32 %v875, 1e-05
        %v877 = vrsqrt.pop %v876
        %v878 = vmul.f32 %v870, %v877
        %v880 = vlaneseq
        %v881 = vshrl.u32 %v880, 7
        %v882 = vsub.s32 0, %v881
        %v883 = vrot.slane %v862, %v882
        %v885 = vmul.f32 %v878, %v883
        %v887 = vlaneseq
        %v888 = vshrl.u32 %v887, 7
        %v889 = vsub.s32 0, %v888
        %v890 = vrot.slane %v863, %v889
        %v892 = vadd.f32 %v885, %v890
        %v893 = vpack.c.bf16 %v892, %v892
        %v894 = vld [vmem:[%s687] sm:$0xf]
        %v895 = vld [vmem:[%s687 + $0x4] sm:$0xf]
        %v896 = vld [vmem:[%s687 + $0x8] sm:$0xf]
        %v897 = vld [vmem:[%s687 + $0xc] sm:$0xf]
        %v898 = vld [vmem:[%s695] sm:$0x1]
        %v900 = vlaneseq
        %v901 = vshrl.u32 %v900, 7
        %v902 = vsub.s32 0, %v901
        %v903 = vrot.slane %v898, %v902
        %v909 = vunpack.c.l.b16 %v894
        %v910 = vunpack.c.l.b16 %v895
        %v911 = vunpack.c.l.b16 %v896
        %v912 = vunpack.c.l.b16 %v897
        %v913 = vpack.c.b16 %v910, %v909
        %v914 = vpack.c.b16 %v912, %v911
        %v918 = vsel %vm864, %v893, 0
        %920 = vmatprep.subr.bf16.mxu0 0
        %921 = vmatpush1.bf16.msra.mxu0 %v913
        %922 = vmatprep.subr.bf16.mxu0 0
        %923 = vmatpush1.bf16.msra.mxu0 %v914
        %924 = vmatprep.subr.bf16.mxu0 0
        %925 = vmatpush1.bf16.msra.mxu0 0
        %926 = vmatprep.subr.bf16.mxu0 0
        %927 = vmatpush1.bf16.msra.mxu0 0
        %928 = vmatprep.subr.bf16.mxu0 0
        %929 = vmatpush1.bf16.msra.mxu0 0
        %930 = vmatprep.subr.bf16.mxu0 0
        %931 = vmatpush1.bf16.msra.mxu0 0
        %932 = vmatprep.subr.bf16.mxu0 0
        %933 = vmatpush1.bf16.msra.mxu0 0
        %934 = vmatprep.subr.bf16.mxu0 0
        %935 = vmatpush1.bf16.msra.mxu0 0
        %936 = vmatprep.subr.bf16.mxu0 0
        %937 = vmatpush1.bf16.msra.mxu0 0
        %938 = vmatprep.subr.bf16.mxu0 0
        %939 = vmatpush1.bf16.msra.mxu0 0
        %940 = vmatprep.subr.bf16.mxu0 0
        %941 = vmatpush1.bf16.msra.mxu0 0
        %942 = vmatprep.subr.bf16.mxu0 0
        %943 = vmatpush1.bf16.msra.mxu0 0
        %944 = vmatprep.subr.bf16.mxu0 0
        %945 = vmatpush1.bf16.msra.mxu0 0
        %946 = vmatprep.subr.bf16.mxu0 0
        %947 = vmatpush1.bf16.msra.mxu0 0
        %948 = vmatprep.subr.bf16.mxu0 0
        %949 = vmatpush1.bf16.msra.mxu0 0
        %950 = vmatprep.subr.bf16.mxu0 0
        %951 = vmatpush1.bf16.msra.mxu0 0
        %952 = vmatprep.mubr.bf16.mxu0 0
        %953 = vmatmul.mubr.bf16.gmra.mrb[0].mxu0 %v918
        %v954 = vpop.f32.mrb[0].mxu0
        %v955 = vadd.f32 %v903, %v954
        %v956 = vpop.f32.mrb[0].mxu0
        %v957 = vpop.f32.mrb[0].mxu0
        %v958 = vpop.f32.mrb[0].mxu0
        %959 = vdwg.mxu0
        %v960 = vmul.f32 %v955, 0.35355338
        %v961 = vpack.c.bf16 %v960, %v960
        %v962 = vpack.c.bf16 %v955, %v955
        %964 = vrot.lane.b32.xlu0 %v962, 96
        %v965 = vpop.permute.xlu0 %964
        %vm966 = vcmask 64512
        %v968 = vsel %vm966, %v961, 0
        %v971 = vsel %vm966, %v965, 0
        %973 = vmatprep.subr.bf16.mxu0 0
        %974 = vmatpush1.bf16.xpose.msra.mxu0 %v971
        %975 = vmatprep.subr.bf16.mxu0 0
        %976 = vmatpush1.bf16.xpose.msra.mxu0 0
        %977 = vmatprep.subr.bf16.mxu0 0
        %978 = vmatpush1.bf16.xpose.msra.mxu0 0
        %979 = vmatprep.subr.bf16.mxu0 0
        %980 = vmatpush1.bf16.xpose.msra.mxu0 0
        %981 = vmatprep.subr.bf16.mxu0 0
        %982 = vmatpush1.bf16.xpose.msra.mxu0 0
        %983 = vmatprep.subr.bf16.mxu0 0
        %984 = vmatpush1.bf16.xpose.msra.mxu0 0
        %985 = vmatprep.subr.bf16.mxu0 0
        %986 = vmatpush1.bf16.xpose.msra.mxu0 0
        %987 = vmatprep.subr.bf16.mxu0 0
        %988 = vmatpush1.bf16.xpose.msra.mxu0 0
        %989 = vmatprep.subr.bf16.mxu0 0
        %990 = vmatpush1.bf16.xpose.msra.mxu0 0
        %991 = vmatprep.subr.bf16.mxu0 0
        %992 = vmatpush1.bf16.xpose.msra.mxu0 0
        %993 = vmatprep.subr.bf16.mxu0 0
        %994 = vmatpush1.bf16.xpose.msra.mxu0 0
        %995 = vmatprep.subr.bf16.mxu0 0
        %996 = vmatpush1.bf16.xpose.msra.mxu0 0
        %997 = vmatprep.subr.bf16.mxu0 0
        %998 = vmatpush1.bf16.xpose.msra.mxu0 0
        %999 = vmatprep.subr.bf16.mxu0 0
        %1000 = vmatpush1.bf16.xpose.msra.mxu0 0
        %1001 = vmatprep.subr.bf16.mxu0 0
        %1002 = vmatpush1.bf16.xpose.msra.mxu0 0
        %1003 = vmatprep.subr.bf16.mxu0 0
        %1004 = vmatpush1.bf16.xpose.msra.mxu0 0
        %1005 = vmatprep.mubr.bf16.mxu0 0
        %1006 = vmatmul.mubr.bf16.gmra.mrb[0].mxu0 %v968
        %v1007 = vpop.f32.mrb[0].mxu0
        %v1008 = vadd.f32 %v861, %v1007
        %v1009 = vpop.f32.mrb[0].mxu0
        %v1010 = vpop.f32.mrb[0].mxu0
        %v1011 = vpop.f32.mrb[0].mxu0
        %1012 = vdwg.mxu0
        %v1013 = vsel %vm966, %v1008, -inf
        %1014 = vmax.xlane.f32.xlu0 %v1013
        %v1015 = vpop.xlane.xlu0 %1014
        %v1016 = vsub.f32 %v1008, %v1015
        %v1017 = vmul.f32 %v1016, 1.442695
        %v1018 = vpow.pop %v1017
        %v1019 = vsel %vm966, %v1018, 0.0
        %1020 = vadd.xlane.f32.xlu0 %v1019
        %v1021 = vpop.xlane.xlu0 %1020
        %v1022 = vrcp.pop %v1021
        %v1023 = vmul.f32 %v1018, %v1022
        %v1024 = vpack.c.bf16 %v1023, %v1023
        %1025 = vrot.lane.b32.xlu0 %v962, 64
        %v1026 = vpop.permute.xlu0 %1025
        %v1028 = vsel %vm966, %v1024, 0
        %vm1030 = vcmask 1043456
        %v1032 = vsel %vm1030, %v1026, 0
        %1034 = vmatprep.subr.bf16.mxu0 0
        %1035 = vmatpush1.bf16.msra.mxu0 %v1032
        %1036 = vmatprep.subr.bf16.mxu0 0
        %1037 = vmatpush1.bf16.msra.mxu0 0
        %1038 = vmatprep.subr.bf16.mxu0 0
        %1039 = vmatpush1.bf16.msra.mxu0 0
        %1040 = vmatprep.subr.bf16.mxu0 0
        %1041 = vmatpush1.bf16.msra.mxu0 0
        %1042 = vmatprep.subr.bf16.mxu0 0
        %1043 = vmatpush1.bf16.msra.mxu0 0
        %1044 = vmatprep.subr.bf16.mxu0 0
        %1045 = vmatpush1.bf16.msra.mxu0 0
        %1046 = vmatprep.subr.bf16.mxu0 0
        %1047 = vmatpush1.bf16.msra.mxu0 0
        %1048 = vmatprep.subr.bf16.mxu0 0
        %1049 = vmatpush1.bf16.msra.mxu0 0
        %1050 = vmatprep.subr.bf16.mxu0 0
        %1051 = vmatpush1.bf16.msra.mxu0 0
        %1052 = vmatprep.subr.bf16.mxu0 0
        %1053 = vmatpush1.bf16.msra.mxu0 0
        %1054 = vmatprep.subr.bf16.mxu0 0
        %1055 = vmatpush1.bf16.msra.mxu0 0
        %1056 = vmatprep.subr.bf16.mxu0 0
        %1057 = vmatpush1.bf16.msra.mxu0 0
        %1058 = vmatprep.subr.bf16.mxu0 0
        %1059 = vmatpush1.bf16.msra.mxu0 0
        %1060 = vmatprep.subr.bf16.mxu0 0
        %1061 = vmatpush1.bf16.msra.mxu0 0
        %1062 = vmatprep.subr.bf16.mxu0 0
        %1063 = vmatpush1.bf16.msra.mxu0 0
        %1064 = vmatprep.subr.bf16.mxu0 0
        %1065 = vmatpush1.bf16.msra.mxu0 0
        %1066 = vmatprep.mubr.bf16.mxu0 0
        %1067 = vmatmul.mubr.bf16.gmra.mrb[0].mxu0 %v1028
        %v1068 = vpop.f32.mrb[0].mxu0
        %v1069 = vadd.f32 0.0, %v1068
        %v1070 = vpop.f32.mrb[0].mxu0
        %v1071 = vpop.f32.mrb[0].mxu0
        %v1072 = vpop.f32.mrb[0].mxu0
        %1073 = vdwg.mxu0
        %1075 = vrot.lane.b32.xlu0 %v961, 120
        %v1076 = vpop.permute.xlu0 %1075
        %1077 = vrot.lane.b32.xlu0 %v962, 88
        %v1078 = vpop.permute.xlu0 %1077
        %v1080 = vsel %vm966, %v1076, 0
        %v1083 = vsel %vm966, %v1078, 0
        %1085 = vmatprep.subr.bf16.mxu0 0
        %1086 = vmatpush1.bf16.xpose.msra.mxu0 %v1083
        %1087 = vmatprep.subr.bf16.mxu0 0
        %1088 = vmatpush1.bf16.xpose.msra.mxu0 0
        %1089 = vmatprep.subr.bf16.mxu0 0
        %1090 = vmatpush1.bf16.xpose.msra.mxu0 0
        %1091 = vmatprep.subr.bf16.mxu0 0
        %1092 = vmatpush1.bf16.xpose.msra.mxu0 0
        %1093 = vmatprep.subr.bf16.mxu0 0
        %1094 = vmatpush1.bf16.xpose.msra.mxu0 0
        %1095 = vmatprep.subr.bf16.mxu0 0
        %1096 = vmatpush1.bf16.xpose.msra.mxu0 0
        %1097 = vmatprep.subr.bf16.mxu0 0
        %1098 = vmatpush1.bf16.xpose.msra.mxu0 0
        %1099 = vmatprep.subr.bf16.mxu0 0
        %1100 = vmatpush1.bf16.xpose.msra.mxu0 0
        %1101 = vmatprep.subr.bf16.mxu0 0
        %1102 = vmatpush1.bf16.xpose.msra.mxu0 0
        %1103 = vmatprep.subr.bf16.mxu0 0
        %1104 = vmatpush1.bf16.xpose.msra.mxu0 0
        %1105 = vmatprep.subr.bf16.mxu0 0
        %1106 = vmatpush1.bf16.xpose.msra.mxu0 0
        %1107 = vmatprep.subr.bf16.mxu0 0
        %1108 = vmatpush1.bf16.xpose.msra.mxu0 0
        %1109 = vmatprep.subr.bf16.mxu0 0
        %1110 = vmatpush1.bf16.xpose.msra.mxu0 0
        %1111 = vmatprep.subr.bf16.mxu0 0
        %1112 = vmatpush1.bf16.xpose.msra.mxu0 0
        %1113 = vmatprep.subr.bf16.mxu0 0
        %1114 = vmatpush1.bf16.xpose.msra.mxu0 0
        %1115 = vmatprep.subr.bf16.mxu0 0
        %1116 = vmatpush1.bf16.xpose.msra.mxu0 0
        %1117 = vmatprep.mubr.bf16.mxu0 0
        %1118 = vmatmul.mubr.bf16.gmra.mrb[0].mxu0 %v1080
        %v1119 = vpop.f32.mrb[0].mxu0
        %v1120 = vadd.f32 %v861, %v1119
        %v1121 = vpop.f32.mrb[0].mxu0
        %v1122 = vpop.f32.mrb[0].mxu0
        %v1123 = vpop.f32.mrb[0].mxu0
        %1124 = vdwg.mxu0
        %v1125 = vsel %vm966, %v1120, -inf
        %1126 = vmax.xlane.f32.xlu0 %v1125
        %v1127 = vpop.xlane.xlu0 %1126
        %v1128 = vsub.f32 %v1120, %v1127
        %v1129 = vmul.f32 %v1128, 1.442695
        %v1130 = vpow.pop %v1129
        %v1131 = vsel %vm966, %v1130, 0.0
        %1132 = vadd.xlane.f32.xlu0 %v1131
        %v1133 = vpop.xlane.xlu0 %1132
        %v1134 = vrcp.pop %v1133
        %v1135 = vmul.f32 %v1130, %v1134
        %v1136 = vpack.c.bf16 %v1135, %v1135
        %1137 = vrot.lane.b32.xlu0 %v962, 56
        %v1138 = vpop.permute.xlu0 %1137
        %v1140 = vsel %vm966, %v1136, 0
        %v1143 = vsel %vm1030, %v1138, 0
        %1145 = vmatprep.subr.bf16.mxu0 0
        %1146 = vmatpush1.bf16.msra.mxu0 %v1143
        %1147 = vmatprep.subr.bf16.mxu0 0
        %1148 = vmatpush1.bf16.msra.mxu0 0
        %1149 = vmatprep.subr.bf16.mxu0 0
        %1150 = vmatpush1.bf16.msra.mxu0 0
        %1151 = vmatprep.subr.bf16.mxu0 0
        %1152 = vmatpush1.bf16.msra.mxu0 0
        %1153 = vmatprep.subr.bf16.mxu0 0
        %1154 = vmatpush1.bf16.msra.mxu0 0
        %1155 = vmatprep.subr.bf16.mxu0 0
        %1156 = vmatpush1.bf16.msra.mxu0 0
        %1157 = vmatprep.subr.bf16.mxu0 0
        %1158 = vmatpush1.bf16.msra.mxu0 0
        %1159 = vmatprep.subr.bf16.mxu0 0
        %1160 = vmatpush1.bf16.msra.mxu0 0
        %1161 = vmatprep.subr.bf16.mxu0 0
        %1162 = vmatpush1.bf16.msra.mxu0 0
        %1163 = vmatprep.subr.bf16.mxu0 0
        %1164 = vmatpush1.bf16.msra.mxu0 0
        %1165 = vmatprep.subr.bf16.mxu0 0
        %1166 = vmatpush1.bf16.msra.mxu0 0
        %1167 = vmatprep.subr.bf16.mxu0 0
        %1168 = vmatpush1.bf16.msra.mxu0 0
        %1169 = vmatprep.subr.bf16.mxu0 0
        %1170 = vmatpush1.bf16.msra.mxu0 0
        %1171 = vmatprep.subr.bf16.mxu0 0
        %1172 = vmatpush1.bf16.msra.mxu0 0
        %1173 = vmatprep.subr.bf16.mxu0 0
        %1174 = vmatpush1.bf16.msra.mxu0 0
        %1175 = vmatprep.subr.bf16.mxu0 0
        %1176 = vmatpush1.bf16.msra.mxu0 0
        %1177 = vmatprep.mubr.bf16.mxu0 0
        %1178 = vmatmul.mubr.bf16.gmra.mrb[0].mxu0 %v1140
        %v1179 = vpop.f32.mrb[0].mxu0
        %v1180 = vadd.f32 0.0, %v1179
        %v1181 = vpop.f32.mrb[0].mxu0
        %v1182 = vpop.f32.mrb[0].mxu0
        %v1183 = vpop.f32.mrb[0].mxu0
        %1184 = vdwg.mxu0
        %1185 = vrot.lane.b32.xlu0 %v961, 112
        %v1186 = vpop.permute.xlu0 %1185
        %1187 = vrot.lane.b32.xlu0 %v962, 80
        %v1188 = vpop.permute.xlu0 %1187
        %v1190 = vsel %vm966, %v1186, 0
        %v1193 = vsel %vm966, %v1188, 0
        %1195 = vmatprep.subr.bf16.mxu0 0
        %1196 = vmatpush1.bf16.xpose.msra.mxu0 %v1193
        %1197 = vmatprep.subr.bf16.mxu0 0
        %1198 = vmatpush1.bf16.xpose.msra.mxu0 0
        %1199 = vmatprep.subr.bf16.mxu0 0
        %1200 = vmatpush1.bf16.xpose.msra.mxu0 0
        %1201 = vmatprep.subr.bf16.mxu0 0
        %1202 = vmatpush1.bf16.xpose.msra.mxu0 0
        %1203 = vmatprep.subr.bf16.mxu0 0
        %1204 = vmatpush1.bf16.xpose.msra.mxu0 0
        %1205 = vmatprep.subr.bf16.mxu0 0
        %1206 = vmatpush1.bf16.xpose.msra.mxu0 0
        %1207 = vmatprep.subr.bf16.mxu0 0
        %1208 = vmatpush1.bf16.xpose.msra.mxu0 0
        %1209 = vmatprep.subr.bf16.mxu0 0
        %1210 = vmatpush1.bf16.xpose.msra.mxu0 0
        %1211 = vmatprep.subr.bf16.mxu0 0
        %1212 = vmatpush1.bf16.xpose.msra.mxu0 0
        %1213 = vmatprep.subr.bf16.mxu0 0
        %1214 = vmatpush1.bf16.xpose.msra.mxu0 0
        %1215 = vmatprep.subr.bf16.mxu0 0
        %1216 = vmatpush1.bf16.xpose.msra.mxu0 0
        %1217 = vmatprep.subr.bf16.mxu0 0
        %1218 = vmatpush1.bf16.xpose.msra.mxu0 0
        %1219 = vmatprep.subr.bf16.mxu0 0
        %1220 = vmatpush1.bf16.xpose.msra.mxu0 0
        %1221 = vmatprep.subr.bf16.mxu0 0
        %1222 = vmatpush1.bf16.xpose.msra.mxu0 0
        %1223 = vmatprep.subr.bf16.mxu0 0
        %1224 = vmatpush1.bf16.xpose.msra.mxu0 0
        %1225 = vmatprep.subr.bf16.mxu0 0
        %1226 = vmatpush1.bf16.xpose.msra.mxu0 0
        %1227 = vmatprep.mubr.bf16.mxu0 0
        %1228 = vmatmul.mubr.bf16.gmra.mrb[0].mxu0 %v1190
        %v1229 = vpop.f32.mrb[0].mxu0
        %v1230 = vadd.f32 %v861, %v1229
        %v1231 = vpop.f32.mrb[0].mxu0
        %v1232 = vpop.f32.mrb[0].mxu0
        %v1233 = vpop.f32.mrb[0].mxu0
        %1234 = vdwg.mxu0
        %v1235 = vsel %vm966, %v1230, -inf
        %1236 = vmax.xlane.f32.xlu0 %v1235
        %v1237 = vpop.xlane.xlu0 %1236
        %v1238 = vsub.f32 %v1230, %v1237
        %v1239 = vmul.f32 %v1238, 1.442695
        %v1240 = vpow.pop %v1239
        %v1241 = vsel %vm966, %v1240, 0.0
        %1242 = vadd.xlane.f32.xlu0 %v1241
        %v1243 = vpop.xlane.xlu0 %1242
        %v1244 = vrcp.pop %v1243
        %v1245 = vmul.f32 %v1240, %v1244
        %v1246 = vpack.c.bf16 %v1245, %v1245
        %1247 = vrot.lane.b32.xlu0 %v962, 48
        %v1248 = vpop.permute.xlu0 %1247
        %v1250 = vsel %vm966, %v1246, 0
        %v1253 = vsel %vm1030, %v1248, 0
        %1255 = vmatprep.subr.bf16.mxu0 0
        %1256 = vmatpush1.bf16.msra.mxu0 %v1253
        %1257 = vmatprep.subr.bf16.mxu0 0
        %1258 = vmatpush1.bf16.msra.mxu0 0
        %1259 = vmatprep.subr.bf16.mxu0 0
        %1260 = vmatpush1.bf16.msra.mxu0 0
        %1261 = vmatprep.subr.bf16.mxu0 0
        %1262 = vmatpush1.bf16.msra.mxu0 0
        %1263 = vmatprep.subr.bf16.mxu0 0
        %1264 = vmatpush1.bf16.msra.mxu0 0
        %1265 = vmatprep.subr.bf16.mxu0 0
        %1266 = vmatpush1.bf16.msra.mxu0 0
        %1267 = vmatprep.subr.bf16.mxu0 0
        %1268 = vmatpush1.bf16.msra.mxu0 0
        %1269 = vmatprep.subr.bf16.mxu0 0
        %1270 = vmatpush1.bf16.msra.mxu0 0
        %1271 = vmatprep.subr.bf16.mxu0 0
        %1272 = vmatpush1.bf16.msra.mxu0 0
        %1273 = vmatprep.subr.bf16.mxu0 0
        %1274 = vmatpush1.bf16.msra.mxu0 0
        %1275 = vmatprep.subr.bf16.mxu0 0
        %1276 = vmatpush1.bf16.msra.mxu0 0
        %1277 = vmatprep.subr.bf16.mxu0 0
        %1278 = vmatpush1.bf16.msra.mxu0 0
        %1279 = vmatprep.subr.bf16.mxu0 0
        %1280 = vmatpush1.bf16.msra.mxu0 0
        %1281 = vmatprep.subr.bf16.mxu0 0
        %1282 = vmatpush1.bf16.msra.mxu0 0
        %1283 = vmatprep.subr.bf16.mxu0 0
        %1284 = vmatpush1.bf16.msra.mxu0 0
        %1285 = vmatprep.subr.bf16.mxu0 0
        %1286 = vmatpush1.bf16.msra.mxu0 0
        %1287 = vmatprep.mubr.bf16.mxu0 0
        %1288 = vmatmul.mubr.bf16.gmra.mrb[0].mxu0 %v1250
        %v1289 = vpop.f32.mrb[0].mxu0
        %v1290 = vadd.f32 0.0, %v1289
        %v1291 = vpop.f32.mrb[0].mxu0
        %v1292 = vpop.f32.mrb[0].mxu0
        %v1293 = vpop.f32.mrb[0].mxu0
        %1294 = vdwg.mxu0
        %1295 = vrot.lane.b32.xlu0 %v961, 104
        %v1296 = vpop.permute.xlu0 %1295
        %1297 = vrot.lane.b32.xlu0 %v962, 72
        %v1298 = vpop.permute.xlu0 %1297
        %v1300 = vsel %vm966, %v1296, 0
        %v1303 = vsel %vm966, %v1298, 0
        %1305 = vmatprep.subr.bf16.mxu0 0
        %1306 = vmatpush1.bf16.xpose.msra.mxu0 %v1303
        %1307 = vmatprep.subr.bf16.mxu0 0
        %1308 = vmatpush1.bf16.xpose.msra.mxu0 0
        %1309 = vmatprep.subr.bf16.mxu0 0
        %1310 = vmatpush1.bf16.xpose.msra.mxu0 0
        %1311 = vmatprep.subr.bf16.mxu0 0
        %1312 = vmatpush1.bf16.xpose.msra.mxu0 0
        %1313 = vmatprep.subr.bf16.mxu0 0
        %1314 = vmatpush1.bf16.xpose.msra.mxu0 0
        %1315 = vmatprep.subr.bf16.mxu0 0
        %1316 = vmatpush1.bf16.xpose.msra.mxu0 0
        %1317 = vmatprep.subr.bf16.mxu0 0
        %1318 = vmatpush1.bf16.xpose.msra.mxu0 0
        %1319 = vmatprep.subr.bf16.mxu0 0
        %1320 = vmatpush1.bf16.xpose.msra.mxu0 0
        %1321 = vmatprep.subr.bf16.mxu0 0
        %1322 = vmatpush1.bf16.xpose.msra.mxu0 0
        %1323 = vmatprep.subr.bf16.mxu0 0
        %1324 = vmatpush1.bf16.xpose.msra.mxu0 0
        %1325 = vmatprep.subr.bf16.mxu0 0
        %1326 = vmatpush1.bf16.xpose.msra.mxu0 0
        %1327 = vmatprep.subr.bf16.mxu0 0
        %1328 = vmatpush1.bf16.xpose.msra.mxu0 0
        %1329 = vmatprep.subr.bf16.mxu0 0
        %1330 = vmatpush1.bf16.xpose.msra.mxu0 0
        %1331 = vmatprep.subr.bf16.mxu0 0
        %1332 = vmatpush1.bf16.xpose.msra.mxu0 0
        %1333 = vmatprep.subr.bf16.mxu0 0
        %1334 = vmatpush1.bf16.xpose.msra.mxu0 0
        %1335 = vmatprep.subr.bf16.mxu0 0
        %1336 = vmatpush1.bf16.xpose.msra.mxu0 0
        %1337 = vmatprep.mubr.bf16.mxu0 0
        %1338 = vmatmul.mubr.bf16.gmra.mrb[0].mxu0 %v1300
        %v1339 = vpop.f32.mrb[0].mxu0
        %v1340 = vadd.f32 %v861, %v1339
        %v1341 = vpop.f32.mrb[0].mxu0
        %v1342 = vpop.f32.mrb[0].mxu0
        %v1343 = vpop.f32.mrb[0].mxu0
        %1344 = vdwg.mxu0
        %v1345 = vsel %vm966, %v1340, -inf
        %1346 = vmax.xlane.f32.xlu0 %v1345
        %v1347 = vpop.xlane.xlu0 %1346
        %v1348 = vsub.f32 %v1340, %v1347
        %v1349 = vmul.f32 %v1348, 1.442695
        %v1350 = vpow.pop %v1349
        %v1351 = vsel %vm966, %v1350, 0.0
        %1352 = vadd.xlane.f32.xlu0 %v1351
        %v1353 = vpop.xlane.xlu0 %1352
        %v1354 = vrcp.pop %v1353
        %v1355 = vmul.f32 %v1350, %v1354
        %v1356 = vpack.c.bf16 %v1355, %v1355
        %1357 = vrot.lane.b32.xlu0 %v962, 40
        %v1358 = vpop.permute.xlu0 %1357
        %v1360 = vsel %vm966, %v1356, 0
        %v1363 = vsel %vm1030, %v1358, 0
        %1365 = vmatprep.subr.bf16.mxu0 0
        %1366 = vmatpush1.bf16.msra.mxu0 %v1363
        %1367 = vmatprep.subr.bf16.mxu0 0
        %1368 = vmatpush1.bf16.msra.mxu0 0
        %1369 = vmatprep.subr.bf16.mxu0 0
        %1370 = vmatpush1.bf16.msra.mxu0 0
        %1371 = vmatprep.subr.bf16.mxu0 0
        %1372 = vmatpush1.bf16.msra.mxu0 0
        %1373 = vmatprep.subr.bf16.mxu0 0
        %1374 = vmatpush1.bf16.msra.mxu0 0
        %1375 = vmatprep.subr.bf16.mxu0 0
        %1376 = vmatpush1.bf16.msra.mxu0 0
        %1377 = vmatprep.subr.bf16.mxu0 0
        %1378 = vmatpush1.bf16.msra.mxu0 0
        %1379 = vmatprep.subr.bf16.mxu0 0
        %1380 = vmatpush1.bf16.msra.mxu0 0
        %1381 = vmatprep.subr.bf16.mxu0 0
        %1382 = vmatpush1.bf16.msra.mxu0 0
        %1383 = vmatprep.subr.bf16.mxu0 0
        %1384 = vmatpush1.bf16.msra.mxu0 0
        %1385 = vmatprep.subr.bf16.mxu0 0
        %1386 = vmatpush1.bf16.msra.mxu0 0
        %1387 = vmatprep.subr.bf16.mxu0 0
        %1388 = vmatpush1.bf16.msra.mxu0 0
        %1389 = vmatprep.subr.bf16.mxu0 0
        %1390 = vmatpush1.bf16.msra.mxu0 0
        %1391 = vmatprep.subr.bf16.mxu0 0
        %1392 = vmatpush1.bf16.msra.mxu0 0
        %1393 = vmatprep.subr.bf16.mxu0 0
        %1394 = vmatpush1.bf16.msra.mxu0 0
        %1395 = vmatprep.subr.bf16.mxu0 0
        %1396 = vmatpush1.bf16.msra.mxu0 0
        %1397 = vmatprep.mubr.bf16.mxu0 0
        %1398 = vmatmul.mubr.bf16.gmra.mrb[0].mxu0 %v1360
        %v1399 = vpop.f32.mrb[0].mxu0
        %v1400 = vadd.f32 0.0, %v1399
        %v1401 = vpop.f32.mrb[0].mxu0
        %v1402 = vpop.f32.mrb[0].mxu0
        %v1403 = vpop.f32.mrb[0].mxu0
        %1404 = vdwg.mxu0
        %1406 = vrot.lane.b32.xlu0 %v1180, 8
        %v1407 = vpop.permute.xlu0 %1406
        %1410 = vrot.lane.b32.xlu0 %v1290, 16
        %v1411 = vpop.permute.xlu0 %1410
        %1414 = vrot.lane.b32.xlu0 %v1400, 24
        %v1415 = vpop.permute.xlu0 %1414
        %v1417 = vsel %vm966, %v1069, %v1407
        %vm1418 = vcmask 130048
        %v1419 = vsel %vm1418, %v1417, %v1411
        %vm1420 = vcmask 195584
        %v1421 = vsel %vm1420, %v1419, %v1415
        %v1422 = vpack.c.bf16 %v1421, %v1421
        %v1423 = vld [vmem:[%s704] sm:$0xf]
        %v1424 = vld [vmem:[%s704 + $0x4] sm:$0xf]
        %v1425 = vld [vmem:[%s704 + $0x8] sm:$0xf]
        %v1426 = vld [vmem:[%s704 + $0xc] sm:$0xf]
        %v1427 = vld [vmem:[%s712] sm:$0x1]
        %v1429 = vlaneseq
        %v1430 = vshrl.u32 %v1429, 7
        %v1431 = vsub.s32 0, %v1430
        %v1432 = vrot.slane %v1427, %v1431
        %v1438 = vunpack.c.l.b16 %v1423
        %v1439 = vunpack.c.l.b16 %v1424
        %v1440 = vunpack.c.l.b16 %v1425
        %v1441 = vunpack.c.l.b16 %v1426
        %v1442 = vpack.c.b16 %v1439, %v1438
        %v1443 = vpack.c.b16 %v1441, %v1440
        %v1447 = vsel %vm864, %v1422, 0
        %1449 = vmatprep.subr.bf16.mxu0 0
        %1450 = vmatpush1.bf16.msra.mxu0 %v1442
        %1451 = vmatprep.subr.bf16.mxu0 0
        %1452 = vmatpush1.bf16.msra.mxu0 %v1443
        %1453 = vmatprep.subr.bf16.mxu0 0
        %1454 = vmatpush1.bf16.msra.mxu0 0
        %1455 = vmatprep.subr.bf16.mxu0 0
        %1456 = vmatpush1.bf16.msra.mxu0 0
        %1457 = vmatprep.subr.bf16.mxu0 0
        %1458 = vmatpush1.bf16.msra.mxu0 0
        %1459 = vmatprep.subr.bf16.mxu0 0
        %1460 = vmatpush1.bf16.msra.mxu0 0
        %1461 = vmatprep.subr.bf16.mxu0 0
        %1462 = vmatpush1.bf16.msra.mxu0 0
        %1463 = vmatprep.subr.bf16.mxu0 0
        %1464 = vmatpush1.bf16.msra.mxu0 0
        %1465 = vmatprep.subr.bf16.mxu0 0
        %1466 = vmatpush1.bf16.msra.mxu0 0
        %1467 = vmatprep.subr.bf16.mxu0 0
        %1468 = vmatpush1.bf16.msra.mxu0 0
        %1469 = vmatprep.subr.bf16.mxu0 0
        %1470 = vmatpush1.bf16.msra.mxu0 0
        %1471 = vmatprep.subr.bf16.mxu0 0
        %1472 = vmatpush1.bf16.msra.mxu0 0
        %1473 = vmatprep.subr.bf16.mxu0 0
        %1474 = vmatpush1.bf16.msra.mxu0 0
        %1475 = vmatprep.subr.bf16.mxu0 0
        %1476 = vmatpush1.bf16.msra.mxu0 0
        %1477 = vmatprep.subr.bf16.mxu0 0
        %1478 = vmatpush1.bf16.msra.mxu0 0
        %1479 = vmatprep.subr.bf16.mxu0 0
        %1480 = vmatpush1.bf16.msra.mxu0 0
        %1481 = vmatprep.mubr.bf16.mxu0 0
        %1482 = vmatmul.mubr.bf16.gmra.mrb[0].mxu0 %v1447
        %v1483 = vpop.f32.mrb[0].mxu0
        %v1484 = vadd.f32 %v1432, %v1483
        %v1485 = vpop.f32.mrb[0].mxu0
        %v1486 = vpop.f32.mrb[0].mxu0
        %v1487 = vpop.f32.mrb[0].mxu0
        %1488 = vdwg.mxu0
        %v1489 = vadd.f32 %v860, %v1484
        %v1490 = vld [vmem:[%s843] sm:$0x1]
        %v1491 = vld [vmem:[%s846] sm:$0x1]
        %v1492 = vsel %vm864, %v1489, 0.0
        %1493 = vadd.xlane.f32.xlu0 %v1492
        %v1494 = vpop.xlane.xlu0 %1493
        %v1495 = vmul.f32 %v1494, %v868
        %v1496 = vsub.f32 %v1489, %v1495
        %v1497 = vmul.f32 %v1496, %v1496
        %v1498 = vsel %vm864, %v1497, 0.0
        %1499 = vadd.xlane.f32.xlu0 %v1498
        %v1500 = vpop.xlane.xlu0 %1499
        %v1501 = vmul.f32 %v1500, %v868
        %v1502 = vadd.f32 %v1501, 1e-05
        %v1503 = vrsqrt.pop %v1502
        %v1504 = vmul.f32 %v1496, %v1503
        %v1506 = vlaneseq
        %v1507 = vshrl.u32 %v1506, 7
        %v1508 = vsub.s32 0, %v1507
        %v1509 = vrot.slane %v1490, %v1508
        %v1511 = vmul.f32 %v1504, %v1509
        %v1513 = vlaneseq
        %v1514 = vshrl.u32 %v1513, 7
        %v1515 = vsub.s32 0, %v1514
        %v1516 = vrot.slane %v1491, %v1515
        %v1518 = vadd.f32 %v1511, %v1516
        %v1519 = vpack.c.bf16 %v1518, %v1518
        %v1520 = vld [vmem:[%s721] sm:$0xf]
        %v1521 = vld [vmem:[%s721 + $0x4] sm:$0xf]
        %v1522 = vld [vmem:[%s721 + $0x8] sm:$0xf]
        %v1523 = vld [vmem:[%s721 + $0xc] sm:$0xf]
        %v1524 = vld [vmem:[%s729] sm:$0x1]
        %v1526 = vlaneseq
        %v1527 = vshrl.u32 %v1526, 7
        %v1528 = vsub.s32 0, %v1527
        %v1529 = vrot.slane %v1524, %v1528
        %v1535 = vunpack.c.l.b16 %v1520
        %v1536 = vunpack.c.l.b16 %v1521
        %v1537 = vunpack.c.l.b16 %v1522
        %v1538 = vunpack.c.l.b16 %v1523
        %v1539 = vpack.c.b16 %v1536, %v1535
        %v1540 = vpack.c.b16 %v1538, %v1537
        %v1544 = vsel %vm864, %v1519, 0
        %1546 = vmatprep.subr.bf16.mxu0 0
        %1547 = vmatpush1.bf16.msra.mxu0 %v1539
        %1548 = vmatprep.subr.bf16.mxu0 0
        %1549 = vmatpush1.bf16.msra.mxu0 %v1540
        %1550 = vmatprep.subr.bf16.mxu0 0
        %1551 = vmatpush1.bf16.msra.mxu0 0
        %1552 = vmatprep.subr.bf16.mxu0 0
        %1553 = vmatpush1.bf16.msra.mxu0 0
        %1554 = vmatprep.subr.bf16.mxu0 0
        %1555 = vmatpush1.bf16.msra.mxu0 0
        %1556 = vmatprep.subr.bf16.mxu0 0
        %1557 = vmatpush1.bf16.msra.mxu0 0
        %1558 = vmatprep.subr.bf16.mxu0 0
        %1559 = vmatpush1.bf16.msra.mxu0 0
        %1560 = vmatprep.subr.bf16.mxu0 0
        %1561 = vmatpush1.bf16.msra.mxu0 0
        %1562 = vmatprep.subr.bf16.mxu0 0
        %1563 = vmatpush1.bf16.msra.mxu0 0
        %1564 = vmatprep.subr.bf16.mxu0 0
        %1565 = vmatpush1.bf16.msra.mxu0 0
        %1566 = vmatprep.subr.bf16.mxu0 0
        %1567 = vmatpush1.bf16.msra.mxu0 0
        %1568 = vmatprep.subr.bf16.mxu0 0
        %1569 = vmatpush1.bf16.msra.mxu0 0
        %1570 = vmatprep.subr.bf16.mxu0 0
        %1571 = vmatpush1.bf16.msra.mxu0 0
        %1572 = vmatprep.subr.bf16.mxu0 0
        %1573 = vmatpush1.bf16.msra.mxu0 0
        %1574 = vmatprep.subr.bf16.mxu0 0
        %1575 = vmatpush1.bf16.msra.mxu0 0
        %1576 = vmatprep.subr.bf16.mxu0 0
        %1577 = vmatpush1.bf16.msra.mxu0 0
        %1578 = vmatprep.mubr.bf16.mxu0 0
        %1579 = vmatmul.mubr.bf16.gmra.mrb[0].mxu0 %v1544
        %v1580 = vpop.f32.mrb[0].mxu0
        %v1581 = vadd.f32 %v1529, %v1580
        %v1582 = vpop.f32.mrb[0].mxu0
        %v1583 = vpop.f32.mrb[0].mxu0
        %v1584 = vpop.f32.mrb[0].mxu0
        %1585 = vdwg.mxu0
        %v1586 = vmul.f32 %v1581, -1.702
        %v1587 = vmul.f32 %v1586, 1.442695
        %v1588 = vpow.pop %v1587
        %v1589 = vadd.f32 %v1588, 1.0
        %v1590 = vrcp.pop %v1589
        %v1591 = vmul.f32 1.0, %v1590
        %v1592 = vmul.f32 %v1581, %v1591
        %v1593 = vpack.c.bf16 %v1592, %v1592
        %v1594 = vld [vmem:[%s851] sm:$0xf]
        %v1595 = vld [vmem:[%s851 + $0x4] sm:$0xf]
        %v1596 = vld [vmem:[%s851 + $0x8] sm:$0xf]
        %v1597 = vld [vmem:[%s851 + $0xc] sm:$0xf]
        %v1598 = vld [vmem:[%s851 + $0x10] sm:$0xf]
        %v1599 = vld [vmem:[%s851 + $0x14] sm:$0xf]
        %v1600 = vld [vmem:[%s851 + $0x18] sm:$0xf]
        %v1601 = vld [vmem:[%s851 + $0x1c] sm:$0xf]
        %v1602 = vld [vmem:[%s737] sm:$0x1]
        %v1604 = vlaneseq
        %v1605 = vshrl.u32 %v1604, 7
        %v1606 = vsub.s32 0, %v1605
        %v1607 = vrot.slane %v1602, %v1606
        %v1617 = vunpack.c.l.b16 %v1594
        %v1618 = vunpack.c.l.b16 %v1595
        %v1619 = vunpack.c.l.b16 %v1596
        %v1620 = vunpack.c.l.b16 %v1597
        %v1621 = vunpack.c.l.b16 %v1598
        %v1622 = vunpack.c.l.b16 %v1599
        %v1623 = vunpack.c.l.b16 %v1600
        %v1624 = vunpack.c.l.b16 %v1601
        %v1625 = vpack.c.b16 %v1618, %v1617
        %v1626 = vpack.c.b16 %v1620, %v1619
        %v1627 = vpack.c.b16 %v1622, %v1621
        %v1628 = vpack.c.b16 %v1624, %v1623
        %vm1633 = vcmask 523264
        %v1635 = vsel %vm1633, %v1593, 0
        %1637 = vmatprep.subr.bf16.mxu0 0
        %1638 = vmatpush1.bf16.msra.mxu0 %v1625
        %1639 = vmatprep.subr.bf16.mxu0 0
        %1640 = vmatpush1.bf16.msra.mxu0 %v1626
        %1641 = vmatprep.subr.bf16.mxu0 0
        %1642 = vmatpush1.bf16.msra.mxu0 %v1627
        %1643 = vmatprep.subr.bf16.mxu0 0
        %1644 = vmatpush1.bf16.msra.mxu0 %v1628
        %1645 = vmatprep.subr.bf16.mxu0 0
        %1646 = vmatpush1.bf16.msra.mxu0 0
        %1647 = vmatprep.subr.bf16.mxu0 0
        %1648 = vmatpush1.bf16.msra.mxu0 0
        %1649 = vmatprep.subr.bf16.mxu0 0
        %1650 = vmatpush1.bf16.msra.mxu0 0
        %1651 = vmatprep.subr.bf16.mxu0 0
        %1652 = vmatpush1.bf16.msra.mxu0 0
        %1653 = vmatprep.subr.bf16.mxu0 0
        %1654 = vmatpush1.bf16.msra.mxu0 0
        %1655 = vmatprep.subr.bf16.mxu0 0
        %1656 = vmatpush1.bf16.msra.mxu0 0
        %1657 = vmatprep.subr.bf16.mxu0 0
        %1658 = vmatpush1.bf16.msra.mxu0 0
        %1659 = vmatprep.subr.bf16.mxu0 0
        %1660 = vmatpush1.bf16.msra.mxu0 0
        %1661 = vmatprep.subr.bf16.mxu0 0
        %1662 = vmatpush1.bf16.msra.mxu0 0
        %1663 = vmatprep.subr.bf16.mxu0 0
        %1664 = vmatpush1.bf16.msra.mxu0 0
        %1665 = vmatprep.subr.bf16.mxu0 0
        %1666 = vmatpush1.bf16.msra.mxu0 0
        %1667 = vmatprep.subr.bf16.mxu0 0
        %1668 = vmatpush1.bf16.msra.mxu0 0
        %1669 = vmatprep.mubr.bf16.mxu0 0
        %1670 = vmatmul.mubr.bf16.gmra.mrb[0].mxu0 %v1635
        %v1671 = vpop.f32.mrb[0].mxu0
        %v1672 = vadd.f32 %v1607, %v1671
        %v1673 = vpop.f32.mrb[0].mxu0
        %v1674 = vpop.f32.mrb[0].mxu0
        %v1675 = vpop.f32.mrb[0].mxu0
        %1676 = vdwg.mxu0
        %v1677 = vadd.f32 %v1489, %v1672
        %1678 = vst.msk [vmem:[#allocation2] sm:$0xff] %vm864, %v1677
        %p1679 = scmp.eq.s32.totalorder %s48, 1
        // Predicated region
        $region117: #{_lambda_.1} parent=75 // pred_check
          %p1680 = pneg %p1679
        $region118: #{_lambda_.1} parent=75 // pred_check_branch
          %1682 = sbr.rel (%p1680) target = $region120
        $region119: #{_lambda_.1} parent=75 // pred_region
          %v1683 = vld [vmem:[#allocation2] sm:$0xff]
          %1684 = vst.msk [vmem:[%s834] sm:$0xff] %vm864, %v1683
        $region120: #{_lambda_.1} parent=75 // pred_fallthru
          _
        %s1685 = sand.u32 %s427, 1
        %s1686 = scalar_lea.sflag [#allocation5], %s1685
        %s1687 = sand.u32 %s427, 1
        %s1688 = smul.addr %s1687, 8
        %s1689 = scalar_lea.vmem [#allocation18], %s1688
        // Predicated region
        $region121: #{_lambda_.1} parent=75 // pred_check
          %p1690 = pneg %p437
        $region122: #{_lambda_.1} parent=75 // pred_check_branch
          %1692 = sbr.rel (%p1690) target = $region124
        $region123: #{_lambda_.1} parent=75 // pred_region
          %s1694 = ssub.s32 128, 128
          %1695 = vsyncadd %s1686, %s1694
          %s1696 = smul.addr %s47, 128
          %s1697 = scalar_lea.hbm %s14, %s1696
          %s1699 = sshll.u32 %s1689, 4
          %s1700 = int_to_ptr.vmem [resolvable:$true] %s1699
          %1702 = dma.vmem_to_hbm [thread:$0]  %s1700, 128, %s1697, %s1686
        $region124: #{_lambda_.1} parent=75 // pred_fallthru
          _
      $region76: #{_lambda_.1} parent=5 // pred_fallthru
        _
      %p1703 = scmp.le.s32.totalorder 2, %s38
      // Predicated region
      $region125: #{_lambda_.1} parent=5 // pred_check
        %p1704 = pneg %p1703
      $region126: #{_lambda_.1} parent=5 // pred_check_branch
        %1706 = sbr.rel (%p1704) target = $region128
      $region127: #{_lambda_.1} parent=5 // pred_region
        %s1707 = ssub.s32 %s38, 2
        // Predicated region
        $region129: #{_lambda_.1} parent=127 // pred_check
          %p1708 = pneg %p443
        $region130: #{_lambda_.1} parent=127 // pred_check_branch
          %1710 = sbr.rel (%p1708) target = $region132
        $region131: #{_lambda_.1} parent=127 // pred_region
          %s1711 = sand.u32 %s428, 1
          %s1712 = scalar_lea.sflag [#allocation5], %s1711
          %s1713 = sand.u32 %s428, 1
          %s1714 = smul.addr %s1713, 8
          %s1715 = scalar_lea.vmem [#allocation18], %s1714
          %1716 = dma.done %s1712, 128
        $region132: #{_lambda_.1} parent=127 // pred_fallthru
          _
      $region128: #{_lambda_.1} parent=5 // pred_fallthru
        _
    $region6: #{_lambda_.1} parent=1 // loop_footer
      %s42 = sadd.s32 1, %s38
    $region7: #{_lambda_.1} parent=1 // loop_footer_branch
      %37 = sbr.rel target = $region3
    $region8: #{_lambda_.1} parent=1 // loop_exit
      _
    %1717 = vsyncpa [#allocation4], 1
    %s1718 = scalar_lea.sflag [#allocation4], 1
    %1719 = vsyncpa %s1718, 1
    %1720 = vsyncpa [#allocation7], 1
    %s1721 = scalar_lea.sflag [#allocation7], 1
    %1722 = vsyncpa %s1721, 1
    %1723 = vsyncpa [#allocation10], 1
    %s1724 = scalar_lea.sflag [#allocation10], 1
    %1725 = vsyncpa %s1724, 1
    %1726 = vsyncpa [#allocation13], 1
    %s1727 = scalar_lea.sflag [#allocation13], 1
    %1728 = vsyncpa %s1727, 1
    %1729 = vsyncpa [#allocation16], 1
    %s1730 = scalar_lea.sflag [#allocation16], 1
    %1731 = vsyncpa %s1730, 1
    %1732 = vsyncpa [#allocation5], 1
    %s1733 = scalar_lea.sflag [#allocation5], 1
    %1734 = vsyncpa %s1733, 1

</llo_original>
